<compile_context>
chip_gen: v6e
topology: v6e:2x2x1
jax: 0.10.0
libtpu: 0.0.40
codegen_flags: <defaults>
</compile_context>

<pallas_src>
import jax
import jax.numpy as jnp
from jax.experimental import pallas as pl
from jax.experimental.pallas import tpu as pltpu


# ----------------------------------------------------------------------------
# Synthetic C_N regular->regular R2Conv parameters (deterministic).
# ----------------------------------------------------------------------------
def _make_c_n_regular_conv_params(key, in_fields, out_fields, N, k, scale=0.1):
    """W[of,go,if,gi] = rot_{go*90deg}(base[of,if,(gi-go) mod N]) (exact for N=4).

    Returned as HWIO (k, k, in_fields*N, out_fields*N) plus bias expanded to be
    constant across the N group channels of each output field.
    """
    # TODO(synk): e2cnn's steerable-basis expansion / He init is not replicated;
    # weights are a deterministic C4 rotate-and-roll construction (init only).
    kb, kbias = jax.random.split(key)
    base = scale * jax.random.normal(kb, (out_fields, in_fields, N, k, k), jnp.float32)
    per_go = []
    for go in range(N):
        shifted = jnp.roll(base, shift=go, axis=2)          # gi -> base[(gi - go) % N]
        rotated = jnp.rot90(shifted, k=go, axes=(-2, -1))   # spatial rotation
        per_go.append(rotated)
    w = jnp.stack(per_go, axis=1)                           # (Of, Ngo, If, Ngi, k, k)
    w = w.reshape(out_fields * N, in_fields * N, k, k)      # OIHW
    w_hwio = jnp.transpose(w, (2, 3, 1, 0))                 # (k, k, Cin, Cout)
    b_fields = scale * jax.random.normal(kbias, (out_fields,), jnp.float32)
    b = jnp.repeat(b_fields, N).reshape(1, out_fields * N)
    return w_hwio, b


# ----------------------------------------------------------------------------
# Kernel
# ----------------------------------------------------------------------------
def _make_kernel(H, W, k, p, c_in, c_hid, has_upscale, JS, JOUT, lead, FLH):
    Wp = W + 2 * p
    nstrips = JOUT // JS
    shift0 = lead - (p * Wp + p)          # hflat index holding hpad_flat[0]
    shift_max = (k - 1) * Wp + (k - 1)
    WIN = JS + shift_max                  # widened im2col window per strip
    taps = [dy * Wp + dx for dy in range(k) for dx in range(k)]
    hdt = jnp.bfloat16                    # hidden-scratch / matmul-operand dtype

    def kernel(xf_ref, m_ref, w1_ref, b1_ref, w2_ref, b2_ref, out_ref, hflat_ref):
        # Zero only the hidden-scratch regions the strip stores below do NOT
        # cover (top padding rows + read-tail margin).  Everything else is fully
        # overwritten every grid step -> no cross-step state, safe with
        # "parallel" batch semantics.
        hflat_ref[:, 0:lead] = jnp.zeros((c_hid, lead), hdt)
        if FLH > lead + JOUT:
            hflat_ref[:, lead + JOUT:FLH] = jnp.zeros((c_hid, FLH - lead - JOUT), hdt)

        # ---- phase 1: fused conv1 (+ upscale residual via stacked weights) ----
        for t in range(nstrips):
            j0 = t * JS
            # One widened lane-dense load per strip, cast to bf16 once, then
            # derive the k*k tap slices from the value (tile-aligned concat on
            # the sublane axis).
            xw = xf_ref[0, :, j0:j0 + WIN].astype(hdt)                 # (c_in, WIN)
            P = jnp.concatenate([xw[:, s:s + JS] for s in taps], axis=0)
            # Weights read at the use site (no long-lived vreg pins).
            y = jnp.dot(w1_ref[...], P, preferred_element_type=jnp.float32)
            y = y + b1_ref[...]                                        # f32 VPU
            h = jnp.maximum(y[:c_hid], 0.0) * m_ref[:, j0:j0 + JS]     # exact zeros at pads
            hflat_ref[:, lead + j0:lead + j0 + JS] = h.astype(hdt)     # aligned store
            if has_upscale:
                # Park the residual rows in the (VMEM-resident) output block.
                out_ref[0, :, j0:j0 + JS] = y[c_hid:]

        # ---- phase 2: conv2 + residual + ReLU ----
        for t in range(nstrips):
            j0 = t * JS
            hw = hflat_ref[:, shift0 + j0:shift0 + j0 + WIN]           # bf16 already
            P2 = jnp.concatenate([hw[:, s:s + JS] for s in taps], axis=0)
            o = jnp.dot(w2_ref[...], P2, preferred_element_type=jnp.float32)
            o = o + b2_ref[...]
            if has_upscale:
                o = o + out_ref[0, :, j0:j0 + JS]                      # read parked residual
            else:
                base = p * Wp + p
                o = o + xf_ref[0, :, base + j0:base + j0 + JS]         # exact f32 identity
            out_ref[0, :, j0:j0 + JS] = jnp.maximum(o, 0.0)            # lane-dense store

    return kernel


# ----------------------------------------------------------------------------
# Wrapper (PyTorch-style NCHW in / NCHW out)
# ----------------------------------------------------------------------------
def equi_res_block(x_nchw, params, *, kernel_size, has_upscale):
    k = kernel_size
    p = (k - 1) // 2
    B, c_in, H, W = x_nchw.shape
    c_hid = params["w1"].shape[-1]
    Hp, Wp = H + 2 * p, W + 2 * p

    rup = lambda v: ((v + 127) // 128) * 128            # lane-tile round-up
    JOUT = rup(H * Wp)                                  # flat output columns (j = y*Wp + x)
    # Strip width: whole image in one dot when small (feeds the 256-wide MXUs on
    # v6e/v7x); otherwise 256/128.  Sweep 128 on v5e for very large maps.
    JS = JOUT if JOUT <= 512 else (256 if JOUT % 256 == 0 else 128)
    lead = rup(p * Wp + p)                              # aligned slot of hpad_flat[p*Wp+p]
    shift_max = (k - 1) * Wp + (k - 1)
    FLX = rup(max(JOUT + shift_max, Hp * Wp))           # flat padded-input length
    FLH = rup(lead - (p * Wp + p) + JOUT + shift_max)   # padded-hidden scratch length

    # Flattened, zero-padded, channel-major input (padding done once host-side so
    # the kernel never memsets / copies a whole padded image).
    x = x_nchw.astype(jnp.float32)
    xpad = jnp.pad(x, ((0, 0), (0, 0), (p, p), (p, p)))           # (B, Cin, Hp, Wp)
    xflat = xpad.reshape(B, c_in, Hp * Wp)
    xflat = jnp.pad(xflat, ((0, 0), (0, 0), (0, FLX - Hp * Wp)))  # (B, Cin, FLX)

    # valid(j) <=> j = y*Wp + x with y < H and x < W
    jj = jnp.arange(JOUT)
    mask = (((jj % Wp) < W) & (jj < (H - 1) * Wp + W)).astype(jnp.float32)
    mask = mask.reshape(1, JOUT)

    # Host-side weight packing: (C_out, k*k*C_in) so each conv is one fat-K matmul.
    # conv1 and upscale share the identical im2col patch, so their packed weights
    # (and biases) are stacked into a single (2*c_hid, k*k*c_in) matrix -> one dot.
    # Matmul operands are bf16; accumulation and all elementwise work stay f32.
    kk = k * k
    w1t = jnp.transpose(params["w1"].reshape(kk * c_in, c_hid))   # (c_hid, kk*c_in)
    w2t = jnp.transpose(params["w2"].reshape(kk * c_hid, c_hid))  # (c_hid, kk*c_hid)
    b1c = params["b1"].reshape(c_hid, 1)
    b2c = params["b2"].reshape(c_hid, 1)
    if has_upscale:
        wut = jnp.transpose(params["wu"].reshape(kk * c_in, c_hid))
        buc = params["bu"].reshape(c_hid, 1)
        w1u = jnp.concatenate([w1t, wut], axis=0).astype(jnp.bfloat16)  # (2*c_hid, kk*c_in)
        b1u = jnp.concatenate([b1c, buc], axis=0)                       # (2*c_hid, 1) f32
    else:
        w1u = w1t.astype(jnp.bfloat16)
        b1u = b1c
    w2b = w2t.astype(jnp.bfloat16)
    m_rows = w1u.shape[0]

    args = [xflat, mask, w1u, b1u, w2b, b2c]
    in_specs = [
        pl.BlockSpec((1, c_in, FLX), lambda b: (b, 0, 0)),
        pl.BlockSpec((1, JOUT), lambda b: (0, 0)),
        pl.BlockSpec((m_rows, kk * c_in), lambda b: (0, 0)),
        pl.BlockSpec((m_rows, 1), lambda b: (0, 0)),
        pl.BlockSpec((c_hid, kk * c_hid), lambda b: (0, 0)),
        pl.BlockSpec((c_hid, 1), lambda b: (0, 0)),
    ]
    # Single bf16 scratch: the padded hidden map.  (The upscale residual is
    # parked in the output block, so no extra scratch buffer.)
    scratch_shapes = [pltpu.VMEM((c_hid, FLH), jnp.bfloat16)]

    kernel = _make_kernel(H, W, k, p, c_in, c_hid, has_upscale,
                          JS, JOUT, lead, FLH)

    out_flat = pl.pallas_call(
        kernel,
        out_shape=jax.ShapeDtypeStruct((B, c_hid, JOUT), jnp.float32),
        grid_spec=pltpu.PrefetchScalarGridSpec(
            num_scalar_prefetch=0,
            grid=(B,),
            in_specs=in_specs,
            out_specs=pl.BlockSpec((1, c_hid, JOUT), lambda b: (b, 0, 0)),
            scratch_shapes=scratch_shapes,
        ),
        compiler_params=pltpu.CompilerParams(
            dimension_semantics=("parallel",)),   # batch axis has no carried state
    )(*args)

    # j = y*Wp + x  ->  NCHW via reshape + slice only (no transposes anywhere).
    out = out_flat[:, :, :H * Wp].reshape(B, c_hid, H, Wp)[:, :, :, :W]
    return out


# ----------------------- pure-JAX reference (for checking) -----------------------
def _conv_ref(x_nchw, w_hwio, b):
    k = w_hwio.shape[0]
    p = (k - 1) // 2
    w_oihw = jnp.transpose(w_hwio, (3, 2, 0, 1))
    y = jax.lax.conv_general_dilated(
        x_nchw, w_oihw, window_strides=(1, 1), padding=((p, p), (p, p)),
        dimension_numbers=("NCHW", "OIHW", "NCHW"),
        precision=jax.lax.Precision.HIGHEST)
    return y + b.reshape(1, -1, 1, 1)


def equi_res_block_ref(x, params, has_upscale):
    h = jax.nn.relu(_conv_ref(x, params["w1"], params["b1"]))
    out = _conv_ref(h, params["w2"], params["b2"])
    if has_upscale:
        out = out + _conv_ref(x, params["wu"], params["bu"])
    else:
        out = out + x
    return jax.nn.relu(out)


if __name__ == "__main__":
    N = 4
    input_channels = 4   # fields
    hidden_dim = 8       # fields
    kernel_size = 3
    B, Hsp, Wsp = 2, 16, 16
    c_in = input_channels * N    # 16
    c_hid = hidden_dim * N       # 32
    has_upscale = input_channels != hidden_dim

    key = jax.random.PRNGKey(0)
    kx, k1, k2, ku = jax.random.split(key, 4)
    x = jax.random.normal(kx, (B, c_in, Hsp, Wsp), jnp.float32)

    w1, b1 = _make_c_n_regular_conv_params(k1, input_channels, hidden_dim, N, kernel_size)
    w2, b2 = _make_c_n_regular_conv_params(k2, hidden_dim, hidden_dim, N, kernel_size)
    params = {"w1": w1, "b1": b1, "w2": w2, "b2": b2}
    if has_upscale:
        wu, bu = _make_c_n_regular_conv_params(ku, input_channels, hidden_dim, N, kernel_size)
        params["wu"] = wu
        params["bu"] = bu

    out = equi_res_block(x, params, kernel_size=kernel_size, has_upscale=has_upscale)
    out = jax.block_until_ready(out)

    ref = equi_res_block_ref(x, params, has_upscale)
    assert out.shape == (B, c_hid, Hsp, Wsp), out.shape
    err = float(jnp.max(jnp.abs(out - ref)))
    scale = float(jnp.max(jnp.abs(ref)))
    # bf16 matmul operands (f32 accumulation): allow 2% of the output range
    # relative to the f32 reference.
    tol = 2e-2 * max(1.0, scale)
    if not err < tol:
        raise AssertionError(f"kernel/reference mismatch, max abs err = {err} (tol {tol})")
    print("KERNEL_OK")
</pallas_src>

<mosaic_0001>
module attributes {stable_mosaic.version = 11 : i64} {
  func.func @kernel(%arg0: i32, %arg1: memref<1x16x512xf32, #tpu.memory_space<vmem>>, %arg2: memref<1x384xf32, #tpu.memory_space<vmem>>, %arg3: memref<64x144xbf16, #tpu.memory_space<vmem>>, %arg4: memref<64x1xf32, #tpu.memory_space<vmem>>, %arg5: memref<32x288xbf16, #tpu.memory_space<vmem>>, %arg6: memref<32x1xf32, #tpu.memory_space<vmem>>, %arg7: memref<1x32x384xf32, #tpu.memory_space<vmem>>, %arg8: memref<32x640xbf16, #tpu.memory_space<vmem>>) attributes {dimension_semantics = [#tpu.dimension_semantics<parallel>], iteration_bounds = array<i64: 2>, scalar_prefetch = 0 : i64, scratch_operands = 1 : i64, tpu.core_type = #tpu.core_type<tc>, window_params = [{transform_indices = @transform_0, window_bounds = array<i64: 1, 16, 512>}, {pipeline_mode = #tpu.pipeline_mode<synchronous>, transform_indices = @transform_1, window_bounds = array<i64: 1, 384>}, {pipeline_mode = #tpu.pipeline_mode<synchronous>, transform_indices = @transform_2, window_bounds = array<i64: 64, 144>}, {pipeline_mode = #tpu.pipeline_mode<synchronous>, transform_indices = @transform_3, window_bounds = array<i64: 64, 1>}, {pipeline_mode = #tpu.pipeline_mode<synchronous>, transform_indices = @transform_4, window_bounds = array<i64: 32, 288>}, {pipeline_mode = #tpu.pipeline_mode<synchronous>, transform_indices = @transform_5, window_bounds = array<i64: 32, 1>}, {transform_indices = @transform_6, window_bounds = array<i64: 1, 32, 384>}]} {
    %cst = arith.constant 0.000000e+00 : bf16
    %0 = vector.broadcast %cst : bf16 to vector<32x128xbf16>
    %c0 = arith.constant 0 : index
    %c0_0 = arith.constant 0 : index
    %1 = vector.load %arg8[%c0, %c0_0] : memref<32x640xbf16, #tpu.memory_space<vmem>>, vector<32x128xbf16>
    tpu.vector_store %arg8[%c0, %c0_0], %0 {strides = array<i32>} : memref<32x640xbf16, #tpu.memory_space<vmem>>, vector<32x128xbf16>,
    %cst_1 = arith.constant 0.000000e+00 : bf16
    %2 = vector.broadcast %cst_1 : bf16 to vector<32x128xbf16>
    %c0_2 = arith.constant 0 : index
    %c512 = arith.constant 512 : index
    %3 = vector.load %arg8[%c0_2, %c512] : memref<32x640xbf16, #tpu.memory_space<vmem>>, vector<32x128xbf16>
    tpu.vector_store %arg8[%c0_2, %c512], %2 {strides = array<i32>} : memref<32x640xbf16, #tpu.memory_space<vmem>>, vector<32x128xbf16>,
    %c0_3 = arith.constant 0 : index
    %c0_4 = arith.constant 0 : index
    %c0_5 = arith.constant 0 : index
    %4 = vector.load %arg1[%c0_3, %c0_4, %c0_5] : memref<1x16x512xf32, #tpu.memory_space<vmem>>, vector<1x16x422xf32>
    %5 = vector.shape_cast %4 : vector<1x16x422xf32> to vector<16x422xf32>
    %6 = arith.truncf %5 : vector<16x422xf32> to vector<16x422xbf16>
    %7 = vector.extract_strided_slice %6 {offsets = [0, 0], sizes = [16, 384], strides = [1, 1]} : vector<16x422xbf16> to vector<16x384xbf16>
    %8 = vector.extract_strided_slice %6 {offsets = [0, 1], sizes = [16, 384], strides = [1, 1]} : vector<16x422xbf16> to vector<16x384xbf16>
    %9 = vector.extract_strided_slice %6 {offsets = [0, 2], sizes = [16, 384], strides = [1, 1]} : vector<16x422xbf16> to vector<16x384xbf16>
    %10 = vector.extract_strided_slice %6 {offsets = [0, 18], sizes = [16, 384], strides = [1, 1]} : vector<16x422xbf16> to vector<16x384xbf16>
    %11 = vector.extract_strided_slice %6 {offsets = [0, 19], sizes = [16, 384], strides = [1, 1]} : vector<16x422xbf16> to vector<16x384xbf16>
    %12 = vector.extract_strided_slice %6 {offsets = [0, 20], sizes = [16, 384], strides = [1, 1]} : vector<16x422xbf16> to vector<16x384xbf16>
    %13 = vector.extract_strided_slice %6 {offsets = [0, 36], sizes = [16, 384], strides = [1, 1]} : vector<16x422xbf16> to vector<16x384xbf16>
    %14 = vector.extract_strided_slice %6 {offsets = [0, 37], sizes = [16, 384], strides = [1, 1]} : vector<16x422xbf16> to vector<16x384xbf16>
    %15 = vector.extract_strided_slice %6 {offsets = [0, 38], sizes = [16, 384], strides = [1, 1]} : vector<16x422xbf16> to vector<16x384xbf16>
    %16 = tpu.concatenate %7, %8, %9, %10, %11, %12, %13, %14, %15 in 0 : vector<16x384xbf16>, vector<16x384xbf16>, vector<16x384xbf16>, vector<16x384xbf16>, vector<16x384xbf16>, vector<16x384xbf16>, vector<16x384xbf16>, vector<16x384xbf16>, vector<16x384xbf16> -> vector<144x384xbf16>
    %c0_6 = arith.constant 0 : index
    %c0_7 = arith.constant 0 : index
    %17 = vector.load %arg3[%c0_6, %c0_7] : memref<64x144xbf16, #tpu.memory_space<vmem>>, vector<64x144xbf16>
    %cst_8 = arith.constant dense<0.000000e+00> : vector<64x384xf32>
    %18 = tpu.matmul %17, %16, %cst_8 {dimension_numbers = #tpu.dot_dimension_numbers<[1], [0], [0], [1], [0, 0, 1, 1], [], []>} : vector<64x144xbf16>, vector<144x384xbf16>, vector<64x384xf32> -> vector<64x384xf32>
    %c0_9 = arith.constant 0 : index
    %c0_10 = arith.constant 0 : index
    %19 = vector.load %arg4[%c0_9, %c0_10] : memref<64x1xf32, #tpu.memory_space<vmem>>, vector<64x1xf32>
    %20 = vector.broadcast %19 : vector<64x1xf32> to vector<64x384xf32>
    %21 = arith.addf %18, %20 : vector<64x384xf32>
    %22 = vector.extract_strided_slice %21 {offsets = [0, 0], sizes = [32, 384], strides = [1, 1]} : vector<64x384xf32> to vector<32x384xf32>
    %cst_11 = arith.constant 0.000000e+00 : f32
    %23 = vector.broadcast %cst_11 : f32 to vector<32x384xf32>
    %24 = arith.maximumf %22, %23 : vector<32x384xf32>
    %c0_12 = arith.constant 0 : index
    %c0_13 = arith.constant 0 : index
    %25 = vector.load %arg2[%c0_12, %c0_13] : memref<1x384xf32, #tpu.memory_space<vmem>>, vector<1x384xf32>
    %26 = vector.broadcast %25 : vector<1x384xf32> to vector<32x384xf32>
    %27 = arith.mulf %24, %26 : vector<32x384xf32>
    %28 = arith.truncf %27 : vector<32x384xf32> to vector<32x384xbf16>
    %c0_14 = arith.constant 0 : index
    %c128 = arith.constant 128 : index
    %29 = vector.load %arg8[%c0_14, %c128] : memref<32x640xbf16, #tpu.memory_space<vmem>>, vector<32x384xbf16>
    tpu.vector_store %arg8[%c0_14, %c128], %28 {strides = array<i32>} : memref<32x640xbf16, #tpu.memory_space<vmem>>, vector<32x384xbf16>,
    %30 = vector.extract_strided_slice %21 {offsets = [32, 0], sizes = [32, 384], strides = [1, 1]} : vector<64x384xf32> to vector<32x384xf32>
    %c0_15 = arith.constant 0 : index
    %c0_16 = arith.constant 0 : index
    %c0_17 = arith.constant 0 : index
    %31 = vector.load %arg7[%c0_15, %c0_16, %c0_17] : memref<1x32x384xf32, #tpu.memory_space<vmem>>, vector<1x32x384xf32>
    %32 = vector.shape_cast %31 : vector<1x32x384xf32> to vector<32x384xf32>
    %33 = vector.shape_cast %30 : vector<32x384xf32> to vector<1x32x384xf32>
    tpu.vector_store %arg7[%c0_15, %c0_16, %c0_17], %33 {strides = array<i32>} : memref<1x32x384xf32, #tpu.memory_space<vmem>>, vector<1x32x384xf32>,
    %c0_18 = arith.constant 0 : index
    %c109 = arith.constant 109 : index
    %34 = vector.load %arg8[%c0_18, %c109] : memref<32x640xbf16, #tpu.memory_space<vmem>>, vector<32x422xbf16>
    %35 = vector.extract_strided_slice %34 {offsets = [0, 0], sizes = [32, 384], strides = [1, 1]} : vector<32x422xbf16> to vector<32x384xbf16>
    %36 = vector.extract_strided_slice %34 {offsets = [0, 1], sizes = [32, 384], strides = [1, 1]} : vector<32x422xbf16> to vector<32x384xbf16>
    %37 = vector.extract_strided_slice %34 {offsets = [0, 2], sizes = [32, 384], strides = [1, 1]} : vector<32x422xbf16> to vector<32x384xbf16>
    %38 = vector.extract_strided_slice %34 {offsets = [0, 18], sizes = [32, 384], strides = [1, 1]} : vector<32x422xbf16> to vector<32x384xbf16>
    %39 = vector.extract_strided_slice %34 {offsets = [0, 19], sizes = [32, 384], strides = [1, 1]} : vector<32x422xbf16> to vector<32x384xbf16>
    %40 = vector.extract_strided_slice %34 {offsets = [0, 20], sizes = [32, 384], strides = [1, 1]} : vector<32x422xbf16> to vector<32x384xbf16>
    %41 = vector.extract_strided_slice %34 {offsets = [0, 36], sizes = [32, 384], strides = [1, 1]} : vector<32x422xbf16> to vector<32x384xbf16>
    %42 = vector.extract_strided_slice %34 {offsets = [0, 37], sizes = [32, 384], strides = [1, 1]} : vector<32x422xbf16> to vector<32x384xbf16>
    %43 = vector.extract_strided_slice %34 {offsets = [0, 38], sizes = [32, 384], strides = [1, 1]} : vector<32x422xbf16> to vector<32x384xbf16>
    %44 = tpu.concatenate %35, %36, %37, %38, %39, %40, %41, %42, %43 in 0 : vector<32x384xbf16>, vector<32x384xbf16>, vector<32x384xbf16>, vector<32x384xbf16>, vector<32x384xbf16>, vector<32x384xbf16>, vector<32x384xbf16>, vector<32x384xbf16>, vector<32x384xbf16> -> vector<288x384xbf16>
    %c0_19 = arith.constant 0 : index
    %c0_20 = arith.constant 0 : index
    %45 = vector.load %arg5[%c0_19, %c0_20] : memref<32x288xbf16, #tpu.memory_space<vmem>>, vector<32x288xbf16>
    %cst_21 = arith.constant dense<0.000000e+00> : vector<32x384xf32>
    %46 = tpu.matmul %45, %44, %cst_21 {dimension_numbers = #tpu.dot_dimension_numbers<[1], [0], [0], [1], [0, 0, 1, 1], [], []>} : vector<32x288xbf16>, vector<288x384xbf16>, vector<32x384xf32> -> vector<32x384xf32>
    %c0_22 = arith.constant 0 : index
    %c0_23 = arith.constant 0 : index
    %47 = vector.load %arg6[%c0_22, %c0_23] : memref<32x1xf32, #tpu.memory_space<vmem>>, vector<32x1xf32>
    %48 = vector.broadcast %47 : vector<32x1xf32> to vector<32x384xf32>
    %49 = arith.addf %46, %48 : vector<32x384xf32>
    %c0_24 = arith.constant 0 : index
    %c0_25 = arith.constant 0 : index
    %c0_26 = arith.constant 0 : index
    %50 = vector.load %arg7[%c0_24, %c0_25, %c0_26] : memref<1x32x384xf32, #tpu.memory_space<vmem>>, vector<1x32x384xf32>
    %51 = vector.shape_cast %50 : vector<1x32x384xf32> to vector<32x384xf32>
    %52 = arith.addf %49, %51 : vector<32x384xf32>
    %cst_27 = arith.constant 0.000000e+00 : f32
    %53 = vector.broadcast %cst_27 : f32 to vector<32x384xf32>
    %54 = arith.maximumf %52, %53 : vector<32x384xf32>
    %c0_28 = arith.constant 0 : index
    %c0_29 = arith.constant 0 : index
    %c0_30 = arith.constant 0 : index
    %55 = vector.load %arg7[%c0_28, %c0_29, %c0_30] : memref<1x32x384xf32, #tpu.memory_space<vmem>>, vector<1x32x384xf32>
    %56 = vector.shape_cast %55 : vector<1x32x384xf32> to vector<32x384xf32>
    %57 = vector.shape_cast %54 : vector<32x384xf32> to vector<1x32x384xf32>
    tpu.vector_store %arg7[%c0_28, %c0_29, %c0_30], %57 {strides = array<i32>} : memref<1x32x384xf32, #tpu.memory_space<vmem>>, vector<1x32x384xf32>,
    return
  }
  func.func @transform_0(%arg0: i32) -> (i32, i32, i32) {
    %c0_i32 = arith.constant 0 : i32
    %c0_i32_0 = arith.constant 0 : i32
    %c0_i32_1 = arith.constant 0 : i32
    return %arg0, %c0_i32, %c0_i32_0 : i32, i32, i32
  }
  func.func @transform_1(%arg0: i32) -> (i32, i32) {
    %c0_i32 = arith.constant 0 : i32
    %c0_i32_0 = arith.constant 0 : i32
    %c0_i32_1 = arith.constant 0 : i32
    return %c0_i32, %c0_i32_0 : i32, i32
  }
  func.func @transform_2(%arg0: i32) -> (i32, i32) {
    %c0_i32 = arith.constant 0 : i32
    %c0_i32_0 = arith.constant 0 : i32
    %c0_i32_1 = arith.constant 0 : i32
    return %c0_i32, %c0_i32_0 : i32, i32
  }
  func.func @transform_3(%arg0: i32) -> (i32, i32) {
    %c0_i32 = arith.constant 0 : i32
    %c0_i32_0 = arith.constant 0 : i32
    %c0_i32_1 = arith.constant 0 : i32
    return %c0_i32, %c0_i32_0 : i32, i32
  }
  func.func @transform_4(%arg0: i32) -> (i32, i32) {
    %c0_i32 = arith.constant 0 : i32
    %c0_i32_0 = arith.constant 0 : i32
    %c0_i32_1 = arith.constant 0 : i32
    return %c0_i32, %c0_i32_0 : i32, i32
  }
  func.func @transform_5(%arg0: i32) -> (i32, i32) {
    %c0_i32 = arith.constant 0 : i32
    %c0_i32_0 = arith.constant 0 : i32
    %c0_i32_1 = arith.constant 0 : i32
    return %c0_i32, %c0_i32_0 : i32, i32
  }
  func.func @transform_6(%arg0: i32) -> (i32, i32, i32) {
    %c0_i32 = arith.constant 0 : i32
    %c0_i32_0 = arith.constant 0 : i32
    %c0_i32_1 = arith.constant 0 : i32
    return %arg0, %c0_i32, %c0_i32_0 : i32, i32, i32
  }
}

</mosaic_0001>

<llo_original>
// kernel: tpu_custom_call.1
$region0: #{tpu_custom_call.1}
  #allocation0 [shape = 'u32[]', space=smem, size = 0x4, offset = 0x4, fixed_abs, tag = 'smem constant byte address 0x4 - core index']
  #allocation1 [shape = 'u32[144,128]{1,0:T(1,128)}', space=vmem, size = 0x12000, scoped, tag = 'internal scratch']
  #allocation2 [shape = 'bf16[32,640]{1,0:T(8,128)(2,1)}', space=vmem, size = 0xa000, scoped, tag = 'scratch operand']
  %s0 = inlined_call_operand.hbm [shape: f32[2,16,512], index: 0, kind: input, shape index: {}]
  %s1 = inlined_call_operand.vmem [shape: f32[1,384], index: 1, kind: input, shape index: {}]
  %s2 = inlined_call_operand.vmem [shape: bf16[64,144], index: 2, kind: input, shape index: {}]
  %s3 = inlined_call_operand.vmem [shape: f32[64,1], index: 3, kind: input, shape index: {}]
  %s4 = inlined_call_operand.hbm [shape: bf16[32,288], index: 4, kind: input, shape index: {}]
  %s5 = inlined_call_operand.vmem [shape: f32[32,1], index: 5, kind: input, shape index: {}]
  %s6 = inlined_call_operand.hbm [shape: f32[2,32,384], index: 6, kind: output, shape index: {}]
  %s7 = sld [smem:[#allocation0]]
  $region65: #{tpu_custom_call.1} parent=0
    _
  %s9 = ssub.s32 1, %s7
  %s10 = scalar_select 0, %s9, %s7
  $region1: #{tpu_custom_call.1} parent=0
    #allocation3 [shape = 'u8[65536]{0}', space=vmem, size = 0x10000, scoped, tag = 'input window, operand 0']
    #allocation4 [shape = 's32[2]{0}', space=sflag, size = 0x8, scoped, tag = 'scoped memory for tpu_custom_call.1']
    #allocation5 [shape = 's32[2]{0}', space=sflag, size = 0x8, scoped, tag = 'scoped memory for tpu_custom_call.1']
    #allocation6 [shape = 'u8[24576]{0}', space=vmem, size = 0x6000, scoped, tag = 'input window, operand 4, single buffered']
    #allocation7 [shape = 's32[1]{0}', space=sflag, size = 0x4, scoped, tag = 'scoped memory for tpu_custom_call.1']
    #allocation8 [shape = 'u8[98304]{0}', space=vmem, size = 0x18000, scoped, tag = 'output window, operand 0']
    %11 = vsyncpa [#allocation4], 0
    %s12 = scalar_lea.sflag [#allocation4], 1
    %13 = vsyncpa %s12, 0
    %14 = vsyncpa [#allocation7], 0
    %15 = vsyncpa [#allocation5], 0
    %s16 = scalar_lea.sflag [#allocation5], 1
    %17 = vsyncpa %s16, 0
    loop: start=0, step=1, limit=4
    $region2: #{tpu_custom_call.1} parent=1 // loop_pre_header
      _
    $region3: #{tpu_custom_call.1} parent=1 // loop_header
      %s19 = sphi 0, %s23
      %p20 = scmp.ge.s32.totalorder %s19, 4
      %s29 = sphi 0, %s31
      %s32 = sphi 0, %s29
      %s33 = sphi 0, %s32
      %s49 = sphi 0, %s33
      %s53 = sphi 0, %s53
      %s55 = sphi 0, %s53
      %s56 = sphi 0, %s55
      %s70 = sphi 0, %s56
      %s74 = sphi 0, %s74
      %s76 = sphi 0, %s74
      %s77 = sphi 0, %s76
      %s91 = sphi 0, %s77
      %s95 = sphi 0, %s95
      %s97 = sphi 0, %s95
      %s98 = sphi 0, %s97
      %s112 = sphi 0, %s98
      %s116 = sphi 0, %s116
      %s118 = sphi 0, %s116
      %s119 = sphi 0, %s118
      %s133 = sphi 0, %s119
      %s137 = sphi 0, %s137
      %s139 = sphi 0, %s137
      %s140 = sphi 0, %s139
      %s154 = sphi 0, %s140
      %s160 = sphi 0, %s162
      %s163 = sphi 0, %s160
      %s164 = sphi 0, %s163
      %s180 = sphi 0, %s164
    $region4: #{tpu_custom_call.1} parent=1 // loop_header_branch
      %22 = sbr.rel (%p20) target = $region8
    $region5: #{tpu_custom_call.1} parent=1 // loop_body
      %s24 = ssub.s32 %s19, 1
      %s25 = ssub.s32 %s19, 2
      %s26 = sadd.s32 %s19, 1
      %s27 = ssub.s32 %s19, %s26
      %p28 = scmp.eq.s32.totalorder %s27, 0
      %s30 = sadd.s32 %s29, 1
      %s31 = scalar_select %p28, %s29, %s30
      %p34 = pneg %p28
      %p35 = scmp.eq.s32.totalorder %s19, 1
      %p36 = por %p34, %p35
      %p37 = scmp.ne.s32.totalorder %s29, %s32
      %p38 = scmp.eq.s32.totalorder %s19, 0
      %p39 = por %p37, %p38
      %p40 = scmp.ne.s32.totalorder %s29, %s32
      %p41 = scmp.eq.s32.totalorder %s24, 1
      %p42 = por %p40, %p41
      %p43 = scmp.ne.s32.totalorder %s32, %s33
      %p44 = scmp.eq.s32.totalorder %s24, 0
      %p45 = por %p43, %p44
      %p46 = scmp.ne.s32.totalorder %s32, %s33
      %p47 = scmp.eq.s32.totalorder %s25, 1
      %p48 = por %p46, %p47
      %p50 = scmp.ne.s32.totalorder %s33, %s49
      %p51 = scmp.eq.s32.totalorder %s25, 0
      %p52 = por %p50, %p51
      %s54 = sadd.s32 %s53, 1
      %p57 = scmp.eq.s32.totalorder %s19, 1
      %p58 = scmp.ne.s32.totalorder %s53, %s55
      %p59 = scmp.eq.s32.totalorder %s19, 0
      %p60 = por %p58, %p59
      %p61 = scmp.ne.s32.totalorder %s53, %s55
      %p62 = scmp.eq.s32.totalorder %s24, 1
      %p63 = por %p61, %p62
      %p64 = scmp.ne.s32.totalorder %s55, %s56
      %p65 = scmp.eq.s32.totalorder %s24, 0
      %p66 = por %p64, %p65
      %p67 = scmp.ne.s32.totalorder %s55, %s56
      %p68 = scmp.eq.s32.totalorder %s25, 1
      %p69 = por %p67, %p68
      %p71 = scmp.ne.s32.totalorder %s56, %s70
      %p72 = scmp.eq.s32.totalorder %s25, 0
      %p73 = por %p71, %p72
      %s75 = sadd.s32 %s74, 1
      %p78 = scmp.eq.s32.totalorder %s19, 1
      %p79 = scmp.ne.s32.totalorder %s74, %s76
      %p80 = scmp.eq.s32.totalorder %s19, 0
      %p81 = por %p79, %p80
      %p82 = scmp.ne.s32.totalorder %s74, %s76
      %p83 = scmp.eq.s32.totalorder %s24, 1
      %p84 = por %p82, %p83
      %p85 = scmp.ne.s32.totalorder %s76, %s77
      %p86 = scmp.eq.s32.totalorder %s24, 0
      %p87 = por %p85, %p86
      %p88 = scmp.ne.s32.totalorder %s76, %s77
      %p89 = scmp.eq.s32.totalorder %s25, 1
      %p90 = por %p88, %p89
      %p92 = scmp.ne.s32.totalorder %s77, %s91
      %p93 = scmp.eq.s32.totalorder %s25, 0
      %p94 = por %p92, %p93
      %s96 = sadd.s32 %s95, 1
      %p99 = scmp.eq.s32.totalorder %s19, 1
      %p100 = scmp.ne.s32.totalorder %s95, %s97
      %p101 = scmp.eq.s32.totalorder %s19, 0
      %p102 = por %p100, %p101
      %p103 = scmp.ne.s32.totalorder %s95, %s97
      %p104 = scmp.eq.s32.totalorder %s24, 1
      %p105 = por %p103, %p104
      %p106 = scmp.ne.s32.totalorder %s97, %s98
      %p107 = scmp.eq.s32.totalorder %s24, 0
      %p108 = por %p106, %p107
      %p109 = scmp.ne.s32.totalorder %s97, %s98
      %p110 = scmp.eq.s32.totalorder %s25, 1
      %p111 = por %p109, %p110
      %p113 = scmp.ne.s32.totalorder %s98, %s112
      %p114 = scmp.eq.s32.totalorder %s25, 0
      %p115 = por %p113, %p114
      %s117 = sadd.s32 %s116, 1
      %p120 = scmp.eq.s32.totalorder %s19, 1
      %p121 = scmp.ne.s32.totalorder %s116, %s118
      %p122 = scmp.eq.s32.totalorder %s19, 0
      %p123 = por %p121, %p122
      %p124 = scmp.ne.s32.totalorder %s116, %s118
      %p125 = scmp.eq.s32.totalorder %s24, 1
      %p126 = por %p124, %p125
      %p127 = scmp.ne.s32.totalorder %s118, %s119
      %p128 = scmp.eq.s32.totalorder %s24, 0
      %p129 = por %p127, %p128
      %p130 = scmp.ne.s32.totalorder %s118, %s119
      %p131 = scmp.eq.s32.totalorder %s25, 1
      %p132 = por %p130, %p131
      %p134 = scmp.ne.s32.totalorder %s119, %s133
      %p135 = scmp.eq.s32.totalorder %s25, 0
      %p136 = por %p134, %p135
      %s138 = sadd.s32 %s137, 1
      %p141 = scmp.eq.s32.totalorder %s19, 1
      %p142 = scmp.ne.s32.totalorder %s137, %s139
      %p143 = scmp.eq.s32.totalorder %s19, 0
      %p144 = por %p142, %p143
      %p145 = scmp.ne.s32.totalorder %s137, %s139
      %p146 = scmp.eq.s32.totalorder %s24, 1
      %p147 = por %p145, %p146
      %p148 = scmp.ne.s32.totalorder %s139, %s140
      %p149 = scmp.eq.s32.totalorder %s24, 0
      %p150 = por %p148, %p149
      %p151 = scmp.ne.s32.totalorder %s139, %s140
      %p152 = scmp.eq.s32.totalorder %s25, 1
      %p153 = por %p151, %p152
      %p155 = scmp.ne.s32.totalorder %s140, %s154
      %p156 = scmp.eq.s32.totalorder %s25, 0
      %p157 = por %p155, %p156
      %s158 = ssub.s32 %s19, %s26
      %p159 = scmp.eq.s32.totalorder %s158, 0
      %s161 = sadd.s32 %s160, 1
      %s162 = scalar_select %p159, %s160, %s161
      %p165 = pneg %p159
      %p166 = scmp.eq.s32.totalorder %s19, 1
      %p167 = por %p165, %p166
      %p168 = scmp.ne.s32.totalorder %s160, %s163
      %p169 = scmp.eq.s32.totalorder %s19, 0
      %p170 = por %p168, %p169
      %p171 = scmp.ne.s32.totalorder %s160, %s163
      %p172 = scmp.eq.s32.totalorder %s24, 1
      %p173 = por %p171, %p172
      %p174 = scmp.ne.s32.totalorder %s163, %s164
      %p175 = scmp.eq.s32.totalorder %s24, 0
      %p176 = por %p174, %p175
      %p177 = scmp.ne.s32.totalorder %s163, %s164
      %p178 = scmp.eq.s32.totalorder %s25, 1
      %p179 = por %p177, %p178
      %p181 = scmp.ne.s32.totalorder %s164, %s180
      %p182 = scmp.eq.s32.totalorder %s25, 0
      %p183 = por %p181, %p182
      %p184 = scmp.le.s32.totalorder 1, %s19
      %p185 = scmp.lt.s32.totalorder %s19, 3
      %p186 = pnand %p184, %p185
      %p187 = pneg %p186
      // Predicated region
      $region9: #{tpu_custom_call.1} parent=5 // pred_check
        _
      $region10: #{tpu_custom_call.1} parent=5 // pred_check_branch
        %189 = sbr.rel (%p186) target = $region12
      $region11: #{tpu_custom_call.1} parent=5 // pred_region
        %s190 = ssub.s32 %s19, 1
        // Predicated region
        $region13: #{tpu_custom_call.1} parent=11 // pred_check
          %p191 = pneg %p66
        $region14: #{tpu_custom_call.1} parent=11 // pred_check_branch
          %193 = sbr.rel (%p191) target = $region16
        $region15: #{tpu_custom_call.1} parent=11 // pred_region
          _
        $region16: #{tpu_custom_call.1} parent=11 // pred_fallthru
          _
        // Predicated region
        $region17: #{tpu_custom_call.1} parent=11 // pred_check
          %p194 = pneg %p87
        $region18: #{tpu_custom_call.1} parent=11 // pred_check_branch
          %196 = sbr.rel (%p194) target = $region20
        $region19: #{tpu_custom_call.1} parent=11 // pred_region
          _
        $region20: #{tpu_custom_call.1} parent=11 // pred_fallthru
          _
        // Predicated region
        $region21: #{tpu_custom_call.1} parent=11 // pred_check
          %p197 = pneg %p108
        $region22: #{tpu_custom_call.1} parent=11 // pred_check_branch
          %199 = sbr.rel (%p197) target = $region24
        $region23: #{tpu_custom_call.1} parent=11 // pred_region
          _
        $region24: #{tpu_custom_call.1} parent=11 // pred_fallthru
          _
        // Predicated region
        $region25: #{tpu_custom_call.1} parent=11 // pred_check
          %p200 = pneg %p129
        $region26: #{tpu_custom_call.1} parent=11 // pred_check_branch
          %202 = sbr.rel (%p200) target = $region28
        $region27: #{tpu_custom_call.1} parent=11 // pred_region
          %s204 = ssub.s32 768, 768
          %205 = vsyncadd [#allocation7], %s204
          %s206 = sshll.u32 [#allocation6], 4
          %s207 = int_to_ptr.vmem [resolvable:$true] %s206
          %212 = dma.hbm_to_vmem [thread:$0]  %s4, 768, %s207, [#allocation7], 192, 192, 12
        $region28: #{tpu_custom_call.1} parent=11 // pred_fallthru
          _
        // Predicated region
        $region29: #{tpu_custom_call.1} parent=11 // pred_check
          %p213 = pneg %p150
        $region30: #{tpu_custom_call.1} parent=11 // pred_check_branch
          %215 = sbr.rel (%p213) target = $region32
        $region31: #{tpu_custom_call.1} parent=11 // pred_region
          _
        $region32: #{tpu_custom_call.1} parent=11 // pred_fallthru
          _
      $region12: #{tpu_custom_call.1} parent=5 // pred_fallthru
        _
      %p216 = scmp.lt.s32.totalorder %s19, 2
      // Predicated region
      $region33: #{tpu_custom_call.1} parent=5 // pred_check
        %p217 = pneg %p216
      $region34: #{tpu_custom_call.1} parent=5 // pred_check_branch
        %219 = sbr.rel (%p217) target = $region36
      $region35: #{tpu_custom_call.1} parent=5 // pred_region
        // Predicated region
        $region37: #{tpu_custom_call.1} parent=35 // pred_check
          %p220 = pneg %p39
        $region38: #{tpu_custom_call.1} parent=35 // pred_check_branch
          %222 = sbr.rel (%p220) target = $region40
        $region39: #{tpu_custom_call.1} parent=35 // pred_region
          %s223 = sand.u32 %s29, 1
          %s224 = scalar_lea.sflag [#allocation4], %s223
          %s225 = sand.u32 %s29, 1
          %s226 = smul.addr %s225, 64
          %s227 = scalar_lea.vmem [#allocation3], %s226
          %s229 = ssub.s32 1024, 1024
          %230 = vsyncadd %s224, %s229
          %s231 = smul.addr %s19, 8
          %s232 = smul.addr %s231, 128
          %s233 = scalar_lea.hbm %s0, %s232
          %s234 = sshll.u32 %s227, 4
          %s235 = int_to_ptr.vmem [resolvable:$true] %s234
          %240 = dma.hbm_to_vmem [thread:$0]  %s233, 1024, %s235, %s224, 512, 512, 32
        $region40: #{tpu_custom_call.1} parent=35 // pred_fallthru
          _
      $region36: #{tpu_custom_call.1} parent=5 // pred_fallthru
        _
      %p241 = scmp.le.s32.totalorder 1, %s19
      %p242 = scmp.lt.s32.totalorder %s19, 3
      %p243 = pnand %p241, %p242
      %p244 = pneg %p243
      // Predicated region
      $region41: #{tpu_custom_call.1} parent=5 // pred_check
        _
      $region42: #{tpu_custom_call.1} parent=5 // pred_check_branch
        %246 = sbr.rel (%p243) target = $region44
      $region43: #{tpu_custom_call.1} parent=5 // pred_region
        %s247 = ssub.s32 %s19, 1
        %s248 = sand.u32 %s32, 1
        %s249 = scalar_lea.sflag [#allocation4], %s248
        %s250 = sand.u32 %s32, 1
        %s251 = smul.addr %s250, 64
        %s252 = scalar_lea.vmem [#allocation3], %s251
        // Predicated region
        $region45: #{tpu_custom_call.1} parent=43 // pred_check
          %p253 = pneg %p45
        $region46: #{tpu_custom_call.1} parent=43 // pred_check_branch
          %255 = sbr.rel (%p253) target = $region48
        $region47: #{tpu_custom_call.1} parent=43 // pred_region
          %256 = dma.done %s249, 1024
        $region48: #{tpu_custom_call.1} parent=43 // pred_fallthru
          _
        // Predicated region
        $region49: #{tpu_custom_call.1} parent=43 // pred_check
          %p257 = pneg %p129
        $region50: #{tpu_custom_call.1} parent=43 // pred_check_branch
          %259 = sbr.rel (%p257) target = $region52
        $region51: #{tpu_custom_call.1} parent=43 // pred_region
          %260 = dma.done [#allocation7], 768
        $region52: #{tpu_custom_call.1} parent=43 // pred_fallthru
          _
        %s261 = sand.u32 %s32, 1
        %s262 = scalar_lea.sflag [#allocation4], %s261
        %s263 = sand.u32 %s32, 1
        %s264 = smul.addr %s263, 64
        %s265 = scalar_lea.vmem [#allocation3], %s264
        %p266 = pneg %p45
        %p267 = pneg %p42
        %p268 = pneg %p66
        %p269 = pneg %p63
        %p270 = pneg %p87
        %p271 = pneg %p84
        %p272 = pneg %p108
        %p273 = pneg %p105
        %p274 = pneg %p129
        %p275 = pneg %p126
        %p276 = pneg %p150
        %p277 = pneg %p147
        %p278 = pneg %p176
        %p279 = pneg %p173
        %s280 = sand.u32 %s163, 1
        %s281 = scalar_lea.sflag [#allocation5], %s280
        %s282 = sand.u32 %s163, 1
        %s283 = smul.addr %s282, 96
        %s284 = scalar_lea.vmem [#allocation8], %s283
        %286 = vst [vmem:[#allocation2] sm:$0xf] 0
        %287 = vst [vmem:[#allocation2 + $0x14] sm:$0xf] 0
        %288 = vst [vmem:[#allocation2 + $0x28] sm:$0xf] 0
        %289 = vst [vmem:[#allocation2 + $0x3c] sm:$0xf] 0
        %290 = vst [vmem:[#allocation2 + $0x10] sm:$0xf] 0
        %291 = vst [vmem:[#allocation2 + $0x24] sm:$0xf] 0
        %292 = vst [vmem:[#allocation2 + $0x38] sm:$0xf] 0
        %293 = vst [vmem:[#allocation2 + $0x4c] sm:$0xf] 0
        %v294 = vld [vmem:[%s252] sm:$0xff]
        %v295 = vld [vmem:[%s252 + $0x8] sm:$0xff]
        %v296 = vld [vmem:[%s252 + $0x10] sm:$0xff]
        %v297 = vld [vmem:[%s252 + $0x18] sm:$0xff]
        %v298 = vld [vmem:[%s252 + $0x20] sm:$0xff]
        %v299 = vld [vmem:[%s252 + $0x28] sm:$0xff]
        %v300 = vld [vmem:[%s252 + $0x30] sm:$0xff]
        %v301 = vld [vmem:[%s252 + $0x38] sm:$0xff]
        %v302 = vpack.c.bf16 %v298, %v294
        %v303 = vpack.c.bf16 %v299, %v295
        %v304 = vpack.c.bf16 %v300, %v296
        %v305 = vpack.c.bf16 %v301, %v297
        %310 = vrot.lane.b32.xlu0 %v302, 127
        %v311 = vpop.permute.xlu0 %310
        %312 = vrot.lane.b32.xlu0 %v303, 127
        %v313 = vpop.permute.xlu0 %312
        %314 = vrot.lane.b32.xlu0 %v304, 127
        %v315 = vpop.permute.xlu0 %314
        %316 = vrot.lane.b32.xlu0 %v305, 127
        %v317 = vpop.permute.xlu0 %316
        %vm318 = vcmask 1039360
        %v319 = vsel %vm318, %v311, %v313
        %v320 = vsel %vm318, %v313, %v315
        %v321 = vsel %vm318, %v315, %v317
        %325 = vrot.lane.b32.xlu0 %v302, 126
        %v326 = vpop.permute.xlu0 %325
        %327 = vrot.lane.b32.xlu0 %v303, 126
        %v328 = vpop.permute.xlu0 %327
        %329 = vrot.lane.b32.xlu0 %v304, 126
        %v330 = vpop.permute.xlu0 %329
        %331 = vrot.lane.b32.xlu0 %v305, 126
        %v332 = vpop.permute.xlu0 %331
        %vm333 = vcmask 1031168
        %v334 = vsel %vm333, %v326, %v328
        %v335 = vsel %vm333, %v328, %v330
        %v336 = vsel %vm333, %v330, %v332
        %340 = vrot.lane.b32.xlu0 %v302, 110
        %v341 = vpop.permute.xlu0 %340
        %342 = vrot.lane.b32.xlu0 %v303, 110
        %v343 = vpop.permute.xlu0 %342
        %344 = vrot.lane.b32.xlu0 %v304, 110
        %v345 = vpop.permute.xlu0 %344
        %346 = vrot.lane.b32.xlu0 %v305, 110
        %v347 = vpop.permute.xlu0 %346
        %vm348 = vcmask 900096
        %v349 = vsel %vm348, %v341, %v343
        %v350 = vsel %vm348, %v343, %v345
        %v351 = vsel %vm348, %v345, %v347
        %355 = vrot.lane.b32.xlu0 %v302, 109
        %v356 = vpop.permute.xlu0 %355
        %357 = vrot.lane.b32.xlu0 %v303, 109
        %v358 = vpop.permute.xlu0 %357
        %359 = vrot.lane.b32.xlu0 %v304, 109
        %v360 = vpop.permute.xlu0 %359
        %361 = vrot.lane.b32.xlu0 %v305, 109
        %v362 = vpop.permute.xlu0 %361
        %vm363 = vcmask 891904
        %v364 = vsel %vm363, %v356, %v358
        %v365 = vsel %vm363, %v358, %v360
        %v366 = vsel %vm363, %v360, %v362
        %370 = vrot.lane.b32.xlu0 %v302, 108
        %v371 = vpop.permute.xlu0 %370
        %372 = vrot.lane.b32.xlu0 %v303, 108
        %v373 = vpop.permute.xlu0 %372
        %374 = vrot.lane.b32.xlu0 %v304, 108
        %v375 = vpop.permute.xlu0 %374
        %376 = vrot.lane.b32.xlu0 %v305, 108
        %v377 = vpop.permute.xlu0 %376
        %vm378 = vcmask 883712
        %v379 = vsel %vm378, %v371, %v373
        %v380 = vsel %vm378, %v373, %v375
        %v381 = vsel %vm378, %v375, %v377
        %385 = vrot.lane.b32.xlu0 %v302, 92
        %v386 = vpop.permute.xlu0 %385
        %387 = vrot.lane.b32.xlu0 %v303, 92
        %v388 = vpop.permute.xlu0 %387
        %389 = vrot.lane.b32.xlu0 %v304, 92
        %v390 = vpop.permute.xlu0 %389
        %391 = vrot.lane.b32.xlu0 %v305, 92
        %v392 = vpop.permute.xlu0 %391
        %vm393 = vcmask 752640
        %v394 = vsel %vm393, %v386, %v388
        %v395 = vsel %vm393, %v388, %v390
        %v396 = vsel %vm393, %v390, %v392
        %400 = vrot.lane.b32.xlu0 %v302, 91
        %v401 = vpop.permute.xlu0 %400
        %402 = vrot.lane.b32.xlu0 %v303, 91
        %v403 = vpop.permute.xlu0 %402
        %404 = vrot.lane.b32.xlu0 %v304, 91
        %v405 = vpop.permute.xlu0 %404
        %406 = vrot.lane.b32.xlu0 %v305, 91
        %v407 = vpop.permute.xlu0 %406
        %vm408 = vcmask 744448
        %v409 = vsel %vm408, %v401, %v403
        %v410 = vsel %vm408, %v403, %v405
        %v411 = vsel %vm408, %v405, %v407
        %415 = vrot.lane.b32.xlu0 %v302, 90
        %v416 = vpop.permute.xlu0 %415
        %417 = vrot.lane.b32.xlu0 %v303, 90
        %v418 = vpop.permute.xlu0 %417
        %419 = vrot.lane.b32.xlu0 %v304, 90
        %v420 = vpop.permute.xlu0 %419
        %421 = vrot.lane.b32.xlu0 %v305, 90
        %v422 = vpop.permute.xlu0 %421
        %vm423 = vcmask 736256
        %v424 = vsel %vm423, %v416, %v418
        %v425 = vsel %vm423, %v418, %v420
        %v426 = vsel %vm423, %v420, %v422
        %v430 = vld [vmem:[%s2] sm:$0xff]
        %v431 = vld [vmem:[%s2 + $0x8] sm:$0xff]
        %v432 = vld [vmem:[%s2 + $0x10] sm:$0xff]
        %v433 = vld [vmem:[%s2 + $0x18] sm:$0xff]
        %v434 = vld [vmem:[%s2 + $0x20] sm:$0xff]
        %v435 = vld [vmem:[%s2 + $0x28] sm:$0xff]
        %v436 = vld [vmem:[%s2 + $0x30] sm:$0xff]
        %v437 = vld [vmem:[%s2 + $0x38] sm:$0xff]
        %v438 = vld [vmem:[%s3] sm:$0xff]
        %v439 = vld [vmem:[%s3 + $0x8] sm:$0xff]
        %v440 = vld [vmem:[%s3 + $0x10] sm:$0xff]
        %v441 = vld [vmem:[%s3 + $0x18] sm:$0xff]
        %v442 = vld [vmem:[%s3 + $0x20] sm:$0xff]
        %v443 = vld [vmem:[%s3 + $0x28] sm:$0xff]
        %v444 = vld [vmem:[%s3 + $0x30] sm:$0xff]
        %v445 = vld [vmem:[%s3 + $0x38] sm:$0xff]
        %447 = vset.pattern.permute.xlu0 0
        %448 = vperm.xlu0 %447, %v438
        %v449 = vpop.permute.xlu0 %448
        %452 = vset.pattern.permute.xlu0 0
        %453 = vperm.xlu0 %452, %v439
        %v454 = vpop.permute.xlu0 %453
        %457 = vset.pattern.permute.xlu0 0
        %458 = vperm.xlu0 %457, %v440
        %v459 = vpop.permute.xlu0 %458
        %462 = vset.pattern.permute.xlu0 0
        %463 = vperm.xlu0 %462, %v441
        %v464 = vpop.permute.xlu0 %463
        %467 = vset.pattern.permute.xlu0 0
        %468 = vperm.xlu0 %467, %v442
        %v469 = vpop.permute.xlu0 %468
        %472 = vset.pattern.permute.xlu0 0
        %473 = vperm.xlu0 %472, %v443
        %v474 = vpop.permute.xlu0 %473
        %477 = vset.pattern.permute.xlu0 0
        %478 = vperm.xlu0 %477, %v444
        %v479 = vpop.permute.xlu0 %478
        %482 = vset.pattern.permute.xlu0 0
        %483 = vperm.xlu0 %482, %v445
        %v484 = vpop.permute.xlu0 %483
        %v494 = vunpack.c.l.b16 %v430
        %v495 = vunpack.c.h.b16 %v430
        %v496 = vunpack.c.l.b16 %v431
        %v497 = vunpack.c.h.b16 %v431
        %v498 = vunpack.c.l.b16 %v432
        %v499 = vunpack.c.h.b16 %v432
        %v500 = vunpack.c.l.b16 %v433
        %v501 = vunpack.c.h.b16 %v433
        %v502 = vunpack.c.l.b16 %v434
        %v503 = vunpack.c.h.b16 %v434
        %v504 = vunpack.c.l.b16 %v435
        %v505 = vunpack.c.h.b16 %v435
        %v506 = vunpack.c.l.b16 %v436
        %v507 = vunpack.c.h.b16 %v436
        %v508 = vunpack.c.l.b16 %v437
        %v509 = vunpack.c.h.b16 %v437
        %v510 = vpack.c.b16 %v496, %v494
        %v511 = vpack.c.b16 %v497, %v495
        %v512 = vpack.c.b16 %v500, %v498
        %v513 = vpack.c.b16 %v501, %v499
        %v514 = vpack.c.b16 %v504, %v502
        %v515 = vpack.c.b16 %v505, %v503
        %v516 = vpack.c.b16 %v508, %v506
        %v517 = vpack.c.b16 %v509, %v507
        %vm522 = vcmask 130048
        %v524 = vsel %vm522, %v511, 0
        %v527 = vsel %vm522, %v513, 0
        %v530 = vsel %vm522, %v515, 0
        %v533 = vsel %vm522, %v517, 0
        %535 = vmatprep.subr.bf16.mxu0 %v410
        %536 = vmatpush1.bf16.msra.mxu0 %v409
        %537 = vmatprep.subr.bf16.mxu0 %v395
        %538 = vmatpush1.bf16.msra.mxu0 %v394
        %539 = vmatprep.subr.bf16.mxu0 %v380
        %540 = vmatpush1.bf16.msra.mxu0 %v379
        %541 = vmatprep.subr.bf16.mxu0 %v365
        %542 = vmatpush1.bf16.msra.mxu0 %v364
        %543 = vmatprep.subr.bf16.mxu0 %v350
        %544 = vmatpush1.bf16.msra.mxu0 %v349
        %545 = vmatprep.subr.bf16.mxu0 %v335
        %546 = vmatpush1.bf16.msra.mxu0 %v334
        %547 = vmatprep.subr.bf16.mxu0 %v320
        %548 = vmatpush1.bf16.msra.mxu0 %v319
        %549 = vmatprep.subr.bf16.mxu0 %v303
        %550 = vmatpush1.bf16.msra.mxu0 %v302
        %551 = vmatprep.subr.bf16.mxu0 0
        %552 = vmatpush2.bf16.msra.mxu0 0
        %553 = vmatprep.subr.bf16.mxu0 0
        %554 = vmatpush2.bf16.msra.mxu0 0
        %555 = vmatprep.subr.bf16.mxu0 0
        %556 = vmatpush2.bf16.msra.mxu0 0
        %557 = vmatprep.subr.bf16.mxu0 0
        %558 = vmatpush2.bf16.msra.mxu0 0
        %559 = vmatprep.subr.bf16.mxu0 0
        %560 = vmatpush2.bf16.msra.mxu0 0
        %561 = vmatprep.subr.bf16.mxu0 0
        %562 = vmatpush2.bf16.msra.mxu0 0
        %563 = vmatprep.subr.bf16.mxu0 0
        %564 = vmatpush2.bf16.msra.mxu0 0
        %565 = vmatprep.subr.bf16.mxu0 %v425
        %566 = vmatpush2.bf16.msra.mxu0 %v424
        %567 = vmatprep.mubr.bf16.mxu0 %v524
        %568 = vmatmul.mubr.bf16.gmra.mxu0 %v510
        %v569 = vpop.f32.mrf.mxu0
        %v570 = vadd.f32 %v449, %v569
        %v571 = vpop.f32.mrf.mxu0
        %v572 = vadd.f32 %v449, %v571
        %v573 = vpop.f32.mrf.mxu0
        %v574 = vadd.f32 %v454, %v573
        %v575 = vpop.f32.mrf.mxu0
        %v576 = vadd.f32 %v454, %v575
        %577 = vmatprep.mubr.bf16.mxu0 %v527
        %578 = vmatmul.mubr.bf16.gmra.mxu0 %v512
        %v579 = vpop.f32.mrf.mxu0
        %v580 = vadd.f32 %v459, %v579
        %v581 = vpop.f32.mrf.mxu0
        %v582 = vadd.f32 %v459, %v581
        %v583 = vpop.f32.mrf.mxu0
        %v584 = vadd.f32 %v464, %v583
        %v585 = vpop.f32.mrf.mxu0
        %v586 = vadd.f32 %v464, %v585
        %587 = vmatprep.mubr.bf16.mxu0 %v530
        %588 = vmatmul.mubr.bf16.gmra.mxu0 %v514
        %v589 = vpop.f32.mrf.mxu0
        %v590 = vadd.f32 %v469, %v589
        %v591 = vpop.f32.mrf.mxu0
        %v592 = vadd.f32 %v469, %v591
        %v593 = vpop.f32.mrf.mxu0
        %v594 = vadd.f32 %v474, %v593
        %v595 = vpop.f32.mrf.mxu0
        %v596 = vadd.f32 %v474, %v595
        %597 = vmatprep.mubr.bf16.mxu0 %v533
        %598 = vmatmul.mubr.bf16.gmra.mxu0 %v516
        %v599 = vpop.f32.mrf.mxu0
        %v600 = vadd.f32 %v479, %v599
        %v601 = vpop.f32.mrf.mxu0
        %v602 = vadd.f32 %v479, %v601
        %v603 = vpop.f32.mrf.mxu0
        %v604 = vadd.f32 %v484, %v603
        %v605 = vpop.f32.mrf.mxu0
        %v606 = vadd.f32 %v484, %v605
        %607 = vdwg.mxu0
        %608 = vmatprep.subr.bf16.mxu0 0
        %609 = vmatpush1.bf16.msra.mxu0 %v411
        %610 = vmatprep.subr.bf16.mxu0 0
        %611 = vmatpush1.bf16.msra.mxu0 %v396
        %612 = vmatprep.subr.bf16.mxu0 0
        %613 = vmatpush1.bf16.msra.mxu0 %v381
        %614 = vmatprep.subr.bf16.mxu0 0
        %615 = vmatpush1.bf16.msra.mxu0 %v366
        %616 = vmatprep.subr.bf16.mxu0 0
        %617 = vmatpush1.bf16.msra.mxu0 %v351
        %618 = vmatprep.subr.bf16.mxu0 0
        %619 = vmatpush1.bf16.msra.mxu0 %v336
        %620 = vmatprep.subr.bf16.mxu0 0
        %621 = vmatpush1.bf16.msra.mxu0 %v321
        %622 = vmatprep.subr.bf16.mxu0 0
        %623 = vmatpush1.bf16.msra.mxu0 %v304
        %624 = vmatprep.subr.bf16.mxu0 0
        %625 = vmatpush2.bf16.msra.mxu0 0
        %626 = vmatprep.subr.bf16.mxu0 0
        %627 = vmatpush2.bf16.msra.mxu0 0
        %628 = vmatprep.subr.bf16.mxu0 0
        %629 = vmatpush2.bf16.msra.mxu0 0
        %630 = vmatprep.subr.bf16.mxu0 0
        %631 = vmatpush2.bf16.msra.mxu0 0
        %632 = vmatprep.subr.bf16.mxu0 0
        %633 = vmatpush2.bf16.msra.mxu0 0
        %634 = vmatprep.subr.bf16.mxu0 0
        %635 = vmatpush2.bf16.msra.mxu0 0
        %636 = vmatprep.subr.bf16.mxu0 0
        %637 = vmatpush2.bf16.msra.mxu0 0
        %638 = vmatprep.subr.bf16.mxu0 0
        %639 = vmatpush2.bf16.msra.mxu0 %v426
        %640 = vmatprep.mubr.bf16.mxu0 %v524
        %641 = vmatmul.mubr.bf16.gmra.mxu0 %v510
        %v642 = vpop.f32.mrf.mxu0
        %v643 = vadd.f32 %v449, %v642
        %v644 = vpop.f32.mrf.mxu0
        %v645 = vpop.f32.mrf.mxu0
        %v646 = vadd.f32 %v454, %v645
        %v647 = vpop.f32.mrf.mxu0
        %648 = vmatprep.mubr.bf16.mxu0 %v527
        %649 = vmatmul.mubr.bf16.gmra.mxu0 %v512
        %v650 = vpop.f32.mrf.mxu0
        %v651 = vadd.f32 %v459, %v650
        %v652 = vpop.f32.mrf.mxu0
        %v653 = vpop.f32.mrf.mxu0
        %v654 = vadd.f32 %v464, %v653
        %v655 = vpop.f32.mrf.mxu0
        %656 = vmatprep.mubr.bf16.mxu0 %v530
        %657 = vmatmul.mubr.bf16.gmra.mxu0 %v514
        %v658 = vpop.f32.mrf.mxu0
        %v659 = vadd.f32 %v469, %v658
        %v660 = vpop.f32.mrf.mxu0
        %v661 = vpop.f32.mrf.mxu0
        %v662 = vadd.f32 %v474, %v661
        %v663 = vpop.f32.mrf.mxu0
        %664 = vmatprep.mubr.bf16.mxu0 %v533
        %665 = vmatmul.mubr.bf16.gmra.mxu0 %v516
        %v666 = vpop.f32.mrf.mxu0
        %v667 = vadd.f32 %v479, %v666
        %v668 = vpop.f32.mrf.mxu0
        %v669 = vpop.f32.mrf.mxu0
        %v670 = vadd.f32 %v484, %v669
        %v671 = vpop.f32.mrf.mxu0
        %672 = vdwg.mxu0
        %v673 = vmax.f32 %v570, 0.0
        %v674 = vmax.f32 %v572, 0.0
        %v675 = vmax.f32 %v643, 0.0
        %v676 = vmax.f32 %v574, 0.0
        %v677 = vmax.f32 %v576, 0.0
        %v678 = vmax.f32 %v646, 0.0
        %v679 = vmax.f32 %v580, 0.0
        %v680 = vmax.f32 %v582, 0.0
        %v681 = vmax.f32 %v651, 0.0
        %v682 = vmax.f32 %v584, 0.0
        %v683 = vmax.f32 %v586, 0.0
        %v684 = vmax.f32 %v654, 0.0
        %v685 = vld [vmem:[%s1] sm:$0x7]
        %v687 = vlaneseq
        %v688 = vshrl.u32 %v687, 7
        %v689 = vsub.s32 0, %v688
        %v690 = vrot.slane %v685, %v689
        %v691 = vlaneseq
        %v692 = vshrl.u32 %v691, 7
        %v693 = vsub.s32 1, %v692
        %v694 = vrot.slane %v685, %v693
        %v695 = vlaneseq
        %v696 = vshrl.u32 %v695, 7
        %v697 = vsub.s32 2, %v696
        %v698 = vrot.slane %v685, %v697
        %v702 = vmul.f32 %v673, %v690
        %v703 = vmul.f32 %v674, %v694
        %v704 = vmul.f32 %v675, %v698
        %v705 = vmul.f32 %v676, %v690
        %v706 = vmul.f32 %v677, %v694
        %v707 = vmul.f32 %v678, %v698
        %v708 = vmul.f32 %v679, %v690
        %v709 = vmul.f32 %v680, %v694
        %v710 = vmul.f32 %v681, %v698
        %v711 = vmul.f32 %v682, %v690
        %v712 = vmul.f32 %v683, %v694
        %v713 = vmul.f32 %v684, %v698
        %v714 = vpack.c.bf16 %v705, %v702
        %v715 = vpack.c.bf16 %v706, %v703
        %v716 = vpack.c.bf16 %v707, %v704
        %v717 = vpack.c.bf16 %v711, %v708
        %v718 = vpack.c.bf16 %v712, %v709
        %v719 = vpack.c.bf16 %v713, %v710
        %v726 = vunpack.c.l.b16 %v714
        %v727 = vunpack.c.l.b16 %v715
        %v728 = vunpack.c.l.b16 %v716
        %v729 = vunpack.c.h.b16 %v714
        %v730 = vunpack.c.h.b16 %v715
        %v731 = vunpack.c.h.b16 %v716
        %v732 = vunpack.c.l.b16 %v717
        %v733 = vunpack.c.l.b16 %v718
        %v734 = vunpack.c.l.b16 %v719
        %v735 = vunpack.c.h.b16 %v717
        %v736 = vunpack.c.h.b16 %v718
        %v737 = vunpack.c.h.b16 %v719
        %v738 = vpack.c.b16 %v727, %v726
        %v739 = vpack.c.b16 %v728, %v728
        %v740 = vpack.c.b16 %v730, %v729
        %v741 = vpack.c.b16 %v731, %v731
        %v742 = vpack.c.b16 %v733, %v732
        %v743 = vpack.c.b16 %v734, %v734
        %v744 = vpack.c.b16 %v736, %v735
        %v745 = vpack.c.b16 %v737, %v737
        %754 = vst [vmem:[#allocation2 + $0x4] sm:$0xff] %v738
        %755 = vst [vmem:[#allocation2 + $0xc] sm:$0xf] %v739
        %756 = vst [vmem:[#allocation2 + $0x18] sm:$0xff] %v740
        %757 = vst [vmem:[#allocation2 + $0x20] sm:$0xf] %v741
        %758 = vst [vmem:[#allocation2 + $0x2c] sm:$0xff] %v742
        %759 = vst [vmem:[#allocation2 + $0x34] sm:$0xf] %v743
        %760 = vst [vmem:[#allocation2 + $0x40] sm:$0xff] %v744
        %761 = vst [vmem:[#allocation2 + $0x48] sm:$0xf] %v745
        %762 = vst [vmem:[%s284] sm:$0xff] %v590
        %763 = vst [vmem:[%s284 + $0x8] sm:$0xff] %v592
        %764 = vst [vmem:[%s284 + $0x10] sm:$0xff] %v659
        %765 = vst [vmem:[%s284 + $0x18] sm:$0xff] %v594
        %766 = vst [vmem:[%s284 + $0x20] sm:$0xff] %v596
        %767 = vst [vmem:[%s284 + $0x28] sm:$0xff] %v662
        %768 = vst [vmem:[%s284 + $0x30] sm:$0xff] %v600
        %769 = vst [vmem:[%s284 + $0x38] sm:$0xff] %v602
        %770 = vst [vmem:[%s284 + $0x40] sm:$0xff] %v667
        %771 = vst [vmem:[%s284 + $0x48] sm:$0xff] %v604
        %772 = vst [vmem:[%s284 + $0x50] sm:$0xff] %v606
        %773 = vst [vmem:[%s284 + $0x58] sm:$0xff] %v670
        %v774 = vld [vmem:[#allocation2] sm:$0xff]
        %v775 = vld [vmem:[#allocation2 + $0x8] sm:$0xff]
        %v776 = vld [vmem:[#allocation2 + $0x10] sm:$0xf]
        %v777 = vld [vmem:[#allocation2 + $0x14] sm:$0xff]
        %v778 = vld [vmem:[#allocation2 + $0x1c] sm:$0xff]
        %v779 = vld [vmem:[#allocation2 + $0x24] sm:$0xf]
        %v780 = vld [vmem:[#allocation2 + $0x28] sm:$0xff]
        %v781 = vld [vmem:[#allocation2 + $0x30] sm:$0xff]
        %v782 = vld [vmem:[#allocation2 + $0x38] sm:$0xf]
        %v783 = vld [vmem:[#allocation2 + $0x3c] sm:$0xff]
        %v784 = vld [vmem:[#allocation2 + $0x44] sm:$0xff]
        %v785 = vld [vmem:[#allocation2 + $0x4c] sm:$0xf]
        %v794 = vunpack.c.l.b16 %v774
        %v795 = vunpack.c.h.b16 %v774
        %v796 = vunpack.c.l.b16 %v775
        %v797 = vunpack.c.h.b16 %v775
        %v798 = vunpack.c.l.b16 %v777
        %v799 = vunpack.c.h.b16 %v777
        %v800 = vunpack.c.l.b16 %v778
        %v801 = vunpack.c.h.b16 %v778
        %v802 = vunpack.c.l.b16 %v780
        %v803 = vunpack.c.h.b16 %v780
        %v804 = vunpack.c.l.b16 %v781
        %v805 = vunpack.c.h.b16 %v781
        %v806 = vunpack.c.l.b16 %v783
        %v807 = vunpack.c.h.b16 %v783
        %v808 = vunpack.c.l.b16 %v784
        %v809 = vunpack.c.h.b16 %v784
        %v810 = vpack.c.b16 %v798, %v794
        %v811 = vpack.c.b16 %v799, %v795
        %v812 = vpack.c.b16 %v800, %v796
        %v813 = vpack.c.b16 %v801, %v797
        %v814 = vpack.c.b16 %v806, %v802
        %v815 = vpack.c.b16 %v807, %v803
        %v816 = vpack.c.b16 %v808, %v804
        %v817 = vpack.c.b16 %v809, %v805
        %818 = vrot.lane.b32.xlu0 %v810, 127
        %v819 = vpop.permute.xlu0 %818
        %820 = vrot.lane.b32.xlu0 %v811, 127
        %v821 = vpop.permute.xlu0 %820
        %822 = vrot.lane.b32.xlu0 %v812, 127
        %v823 = vpop.permute.xlu0 %822
        %824 = vrot.lane.b32.xlu0 %v813, 127
        %v825 = vpop.permute.xlu0 %824
        %826 = vrot.lane.b32.xlu0 %v814, 127
        %v827 = vpop.permute.xlu0 %826
        %828 = vrot.lane.b32.xlu0 %v815, 127
        %v829 = vpop.permute.xlu0 %828
        %830 = vrot.lane.b32.xlu0 %v816, 127
        %v831 = vpop.permute.xlu0 %830
        %832 = vrot.lane.b32.xlu0 %v817, 127
        %v833 = vpop.permute.xlu0 %832
        %v834 = vsel %vm318, %v819, %v821
        %v835 = vsel %vm318, %v821, %v823
        %v836 = vsel %vm318, %v823, %v825
        %v837 = vsel %vm318, %v827, %v829
        %v838 = vsel %vm318, %v829, %v831
        %v839 = vsel %vm318, %v831, %v833
        %840 = vrot.lane.b32.xlu0 %v810, 126
        %v841 = vpop.permute.xlu0 %840
        %842 = vrot.lane.b32.xlu0 %v811, 126
        %v843 = vpop.permute.xlu0 %842
        %844 = vrot.lane.b32.xlu0 %v812, 126
        %v845 = vpop.permute.xlu0 %844
        %846 = vrot.lane.b32.xlu0 %v813, 126
        %v847 = vpop.permute.xlu0 %846
        %848 = vrot.lane.b32.xlu0 %v814, 126
        %v849 = vpop.permute.xlu0 %848
        %850 = vrot.lane.b32.xlu0 %v815, 126
        %v851 = vpop.permute.xlu0 %850
        %852 = vrot.lane.b32.xlu0 %v816, 126
        %v853 = vpop.permute.xlu0 %852
        %854 = vrot.lane.b32.xlu0 %v817, 126
        %v855 = vpop.permute.xlu0 %854
        %v856 = vsel %vm333, %v841, %v843
        %v857 = vsel %vm333, %v843, %v845
        %v858 = vsel %vm333, %v845, %v847
        %v859 = vsel %vm333, %v849, %v851
        %v860 = vsel %vm333, %v851, %v853
        %v861 = vsel %vm333, %v853, %v855
        %862 = vrot.lane.b32.xlu0 %v810, 110
        %v863 = vpop.permute.xlu0 %862
        %864 = vrot.lane.b32.xlu0 %v811, 110
        %v865 = vpop.permute.xlu0 %864
        %866 = vrot.lane.b32.xlu0 %v812, 110
        %v867 = vpop.permute.xlu0 %866
        %868 = vrot.lane.b32.xlu0 %v813, 110
        %v869 = vpop.permute.xlu0 %868
        %870 = vrot.lane.b32.xlu0 %v814, 110
        %v871 = vpop.permute.xlu0 %870
        %872 = vrot.lane.b32.xlu0 %v815, 110
        %v873 = vpop.permute.xlu0 %872
        %874 = vrot.lane.b32.xlu0 %v816, 110
        %v875 = vpop.permute.xlu0 %874
        %876 = vrot.lane.b32.xlu0 %v817, 110
        %v877 = vpop.permute.xlu0 %876
        %v878 = vsel %vm348, %v863, %v865
        %v879 = vsel %vm348, %v865, %v867
        %v880 = vsel %vm348, %v867, %v869
        %v881 = vsel %vm348, %v871, %v873
        %v882 = vsel %vm348, %v873, %v875
        %v883 = vsel %vm348, %v875, %v877
        %884 = vrot.lane.b32.xlu0 %v811, 109
        %v885 = vpop.permute.xlu0 %884
        %886 = vrot.lane.b32.xlu0 %v812, 109
        %v887 = vpop.permute.xlu0 %886
        %888 = vrot.lane.b32.xlu0 %v813, 109
        %v889 = vpop.permute.xlu0 %888
        %890 = vrot.lane.b32.xlu0 %v815, 109
        %v891 = vpop.permute.xlu0 %890
        %892 = vrot.lane.b32.xlu0 %v816, 109
        %v893 = vpop.permute.xlu0 %892
        %894 = vrot.lane.b32.xlu0 %v817, 109
        %v895 = vpop.permute.xlu0 %894
        %v896 = vsel %vm363, %v885, %v887
        %v897 = vsel %vm363, %v887, %v889
        %v898 = vsel %vm363, %v891, %v893
        %v899 = vsel %vm363, %v893, %v895
        %v904 = vunpack.c.l.b16 %v776
        %v905 = vunpack.c.l.b16 %v779
        %v906 = vunpack.c.l.b16 %v782
        %v907 = vunpack.c.l.b16 %v785
        %v908 = vpack.c.b16 %v905, %v904
        %v909 = vpack.c.b16 %v907, %v906
        %910 = vrot.lane.b32.xlu0 %v811, 108
        %v911 = vpop.permute.xlu0 %910
        %912 = vrot.lane.b32.xlu0 %v812, 108
        %v913 = vpop.permute.xlu0 %912
        %914 = vrot.lane.b32.xlu0 %v813, 108
        %v915 = vpop.permute.xlu0 %914
        %916 = vrot.lane.b32.xlu0 %v908, 108
        %v917 = vpop.permute.xlu0 %916
        %918 = vrot.lane.b32.xlu0 %v815, 108
        %v919 = vpop.permute.xlu0 %918
        %920 = vrot.lane.b32.xlu0 %v816, 108
        %v921 = vpop.permute.xlu0 %920
        %922 = vrot.lane.b32.xlu0 %v817, 108
        %v923 = vpop.permute.xlu0 %922
        %924 = vrot.lane.b32.xlu0 %v909, 108
        %v925 = vpop.permute.xlu0 %924
        %v926 = vsel %vm378, %v911, %v913
        %v927 = vsel %vm378, %v913, %v915
        %v928 = vsel %vm378, %v915, %v917
        %v929 = vsel %vm378, %v919, %v921
        %v930 = vsel %vm378, %v921, %v923
        %v931 = vsel %vm378, %v923, %v925
        %932 = vrot.lane.b32.xlu0 %v811, 92
        %v933 = vpop.permute.xlu0 %932
        %934 = vrot.lane.b32.xlu0 %v812, 92
        %v935 = vpop.permute.xlu0 %934
        %936 = vrot.lane.b32.xlu0 %v813, 92
        %v937 = vpop.permute.xlu0 %936
        %938 = vrot.lane.b32.xlu0 %v908, 92
        %v939 = vpop.permute.xlu0 %938
        %940 = vrot.lane.b32.xlu0 %v815, 92
        %v941 = vpop.permute.xlu0 %940
        %942 = vrot.lane.b32.xlu0 %v816, 92
        %v943 = vpop.permute.xlu0 %942
        %944 = vrot.lane.b32.xlu0 %v817, 92
        %v945 = vpop.permute.xlu0 %944
        %946 = vrot.lane.b32.xlu0 %v909, 92
        %v947 = vpop.permute.xlu0 %946
        %v948 = vsel %vm393, %v933, %v935
        %v949 = vsel %vm393, %v935, %v937
        %v950 = vsel %vm393, %v937, %v939
        %v951 = vsel %vm393, %v941, %v943
        %v952 = vsel %vm393, %v943, %v945
        %v953 = vsel %vm393, %v945, %v947
        %954 = vrot.lane.b32.xlu0 %v811, 91
        %v955 = vpop.permute.xlu0 %954
        %956 = vrot.lane.b32.xlu0 %v812, 91
        %v957 = vpop.permute.xlu0 %956
        %958 = vrot.lane.b32.xlu0 %v813, 91
        %v959 = vpop.permute.xlu0 %958
        %960 = vrot.lane.b32.xlu0 %v908, 91
        %v961 = vpop.permute.xlu0 %960
        %962 = vrot.lane.b32.xlu0 %v815, 91
        %v963 = vpop.permute.xlu0 %962
        %964 = vrot.lane.b32.xlu0 %v816, 91
        %v965 = vpop.permute.xlu0 %964
        %966 = vrot.lane.b32.xlu0 %v817, 91
        %v967 = vpop.permute.xlu0 %966
        %968 = vrot.lane.b32.xlu0 %v909, 91
        %v969 = vpop.permute.xlu0 %968
        %v970 = vsel %vm408, %v955, %v957
        %v971 = vsel %vm408, %v957, %v959
        %v972 = vsel %vm408, %v959, %v961
        %v973 = vsel %vm408, %v963, %v965
        %v974 = vsel %vm408, %v965, %v967
        %v975 = vsel %vm408, %v967, %v969
        %976 = vrot.lane.b32.xlu0 %v811, 90
        %v977 = vpop.permute.xlu0 %976
        %978 = vrot.lane.b32.xlu0 %v812, 90
        %v979 = vpop.permute.xlu0 %978
        %980 = vrot.lane.b32.xlu0 %v813, 90
        %v981 = vpop.permute.xlu0 %980
        %982 = vrot.lane.b32.xlu0 %v908, 90
        %v983 = vpop.permute.xlu0 %982
        %984 = vrot.lane.b32.xlu0 %v815, 90
        %v985 = vpop.permute.xlu0 %984
        %986 = vrot.lane.b32.xlu0 %v816, 90
        %v987 = vpop.permute.xlu0 %986
        %988 = vrot.lane.b32.xlu0 %v817, 90
        %v989 = vpop.permute.xlu0 %988
        %990 = vrot.lane.b32.xlu0 %v909, 90
        %v991 = vpop.permute.xlu0 %990
        %v992 = vsel %vm423, %v977, %v979
        %v993 = vsel %vm423, %v979, %v981
        %v994 = vsel %vm423, %v981, %v983
        %v995 = vsel %vm423, %v985, %v987
        %v996 = vsel %vm423, %v987, %v989
        %v997 = vsel %vm423, %v989, %v991
        %v998 = vld [vmem:[#allocation6] sm:$0xff]
        %v999 = vld [vmem:[#allocation6 + $0x8] sm:$0xf]
        %v1000 = vld [vmem:[#allocation6 + $0xc] sm:$0xff]
        %v1001 = vld [vmem:[#allocation6 + $0x14] sm:$0xf]
        %v1002 = vld [vmem:[#allocation6 + $0x18] sm:$0xff]
        %v1003 = vld [vmem:[#allocation6 + $0x20] sm:$0xf]
        %v1004 = vld [vmem:[#allocation6 + $0x24] sm:$0xff]
        %v1005 = vld [vmem:[#allocation6 + $0x2c] sm:$0xf]
        %v1006 = vld [vmem:[%s5] sm:$0xff]
        %v1007 = vld [vmem:[%s5 + $0x8] sm:$0xff]
        %v1008 = vld [vmem:[%s5 + $0x10] sm:$0xff]
        %v1009 = vld [vmem:[%s5 + $0x18] sm:$0xff]
        %1011 = vset.pattern.permute.xlu0 0
        %1012 = vperm.xlu0 %1011, %v1006
        %v1013 = vpop.permute.xlu0 %1012
        %1016 = vset.pattern.permute.xlu0 0
        %1017 = vperm.xlu0 %1016, %v1007
        %v1018 = vpop.permute.xlu0 %1017
        %1021 = vset.pattern.permute.xlu0 0
        %1022 = vperm.xlu0 %1021, %v1008
        %v1023 = vpop.permute.xlu0 %1022
        %1026 = vset.pattern.permute.xlu0 0
        %1027 = vperm.xlu0 %1026, %v1009
        %v1028 = vpop.permute.xlu0 %1027
        %v1038 = vunpack.c.l.b16 %v998
        %v1039 = vunpack.c.h.b16 %v998
        %v1040 = vunpack.c.l.b16 %v999
        %v1041 = vunpack.c.l.b16 %v1000
        %v1042 = vunpack.c.h.b16 %v1000
        %v1043 = vunpack.c.l.b16 %v1001
        %v1044 = vunpack.c.l.b16 %v1002
        %v1045 = vunpack.c.h.b16 %v1002
        %v1046 = vunpack.c.l.b16 %v1003
        %v1047 = vunpack.c.l.b16 %v1004
        %v1048 = vunpack.c.h.b16 %v1004
        %v1049 = vunpack.c.l.b16 %v1005
        %v1050 = vpack.c.b16 %v1041, %v1038
        %v1051 = vpack.c.b16 %v1042, %v1039
        %v1052 = vpack.c.b16 %v1043, %v1040
        %v1053 = vpack.c.b16 %v1047, %v1044
        %v1054 = vpack.c.b16 %v1048, %v1045
        %v1055 = vpack.c.b16 %v1049, %v1046
        %1060 = vrot.lane.b32.xlu0 %v810, 19
        %v1061 = vpop.permute.xlu0 %1060
        %1062 = vrot.lane.b32.xlu0 %v811, 19
        %v1063 = vpop.permute.xlu0 %1062
        %1064 = vrot.lane.b32.xlu0 %v812, 19
        %v1065 = vpop.permute.xlu0 %1064
        %1066 = vrot.lane.b32.xlu0 %v813, 19
        %v1067 = vpop.permute.xlu0 %1066
        %1068 = vrot.lane.b32.xlu0 %v814, 19
        %v1069 = vpop.permute.xlu0 %1068
        %1070 = vrot.lane.b32.xlu0 %v815, 19
        %v1071 = vpop.permute.xlu0 %1070
        %1072 = vrot.lane.b32.xlu0 %v816, 19
        %v1073 = vpop.permute.xlu0 %1072
        %1074 = vrot.lane.b32.xlu0 %v817, 19
        %v1075 = vpop.permute.xlu0 %1074
        %1076 = vrot.lane.b32.xlu0 %v834, 19
        %v1077 = vpop.permute.xlu0 %1076
        %1078 = vrot.lane.b32.xlu0 %v835, 19
        %v1079 = vpop.permute.xlu0 %1078
        %1080 = vrot.lane.b32.xlu0 %v836, 19
        %v1081 = vpop.permute.xlu0 %1080
        %1082 = vrot.lane.b32.xlu0 %v825, 19
        %v1083 = vpop.permute.xlu0 %1082
        %1084 = vrot.lane.b32.xlu0 %v837, 19
        %v1085 = vpop.permute.xlu0 %1084
        %1086 = vrot.lane.b32.xlu0 %v838, 19
        %v1087 = vpop.permute.xlu0 %1086
        %1088 = vrot.lane.b32.xlu0 %v839, 19
        %v1089 = vpop.permute.xlu0 %1088
        %1090 = vrot.lane.b32.xlu0 %v833, 19
        %v1091 = vpop.permute.xlu0 %1090
        %1092 = vrot.lane.b32.xlu0 %v856, 19
        %v1093 = vpop.permute.xlu0 %1092
        %1094 = vrot.lane.b32.xlu0 %v857, 19
        %v1095 = vpop.permute.xlu0 %1094
        %1096 = vrot.lane.b32.xlu0 %v858, 19
        %v1097 = vpop.permute.xlu0 %1096
        %1098 = vrot.lane.b32.xlu0 %v847, 19
        %v1099 = vpop.permute.xlu0 %1098
        %1100 = vrot.lane.b32.xlu0 %v859, 19
        %v1101 = vpop.permute.xlu0 %1100
        %1102 = vrot.lane.b32.xlu0 %v860, 19
        %v1103 = vpop.permute.xlu0 %1102
        %1104 = vrot.lane.b32.xlu0 %v861, 19
        %v1105 = vpop.permute.xlu0 %1104
        %1106 = vrot.lane.b32.xlu0 %v855, 19
        %v1107 = vpop.permute.xlu0 %1106
        %1108 = vrot.lane.b32.xlu0 %v878, 19
        %v1109 = vpop.permute.xlu0 %1108
        %1110 = vrot.lane.b32.xlu0 %v879, 19
        %v1111 = vpop.permute.xlu0 %1110
        %1112 = vrot.lane.b32.xlu0 %v880, 19
        %v1113 = vpop.permute.xlu0 %1112
        %1114 = vrot.lane.b32.xlu0 %v869, 19
        %v1115 = vpop.permute.xlu0 %1114
        %1116 = vrot.lane.b32.xlu0 %v881, 19
        %v1117 = vpop.permute.xlu0 %1116
        %1118 = vrot.lane.b32.xlu0 %v882, 19
        %v1119 = vpop.permute.xlu0 %1118
        %1120 = vrot.lane.b32.xlu0 %v883, 19
        %v1121 = vpop.permute.xlu0 %1120
        %1122 = vrot.lane.b32.xlu0 %v877, 19
        %v1123 = vpop.permute.xlu0 %1122
        %1124 = vrot.lane.b32.xlu0 %v885, 19
        %v1125 = vpop.permute.xlu0 %1124
        %1126 = vrot.lane.b32.xlu0 %v896, 19
        %v1127 = vpop.permute.xlu0 %1126
        %1128 = vrot.lane.b32.xlu0 %v897, 19
        %v1129 = vpop.permute.xlu0 %1128
        %1130 = vrot.lane.b32.xlu0 %v889, 19
        %v1131 = vpop.permute.xlu0 %1130
        %1132 = vrot.lane.b32.xlu0 %v891, 19
        %v1133 = vpop.permute.xlu0 %1132
        %1134 = vrot.lane.b32.xlu0 %v898, 19
        %v1135 = vpop.permute.xlu0 %1134
        %1136 = vrot.lane.b32.xlu0 %v899, 19
        %v1137 = vpop.permute.xlu0 %1136
        %1138 = vrot.lane.b32.xlu0 %v895, 19
        %v1139 = vpop.permute.xlu0 %1138
        %1140 = vrot.lane.b32.xlu0 %v911, 19
        %v1141 = vpop.permute.xlu0 %1140
        %1142 = vrot.lane.b32.xlu0 %v926, 19
        %v1143 = vpop.permute.xlu0 %1142
        %1144 = vrot.lane.b32.xlu0 %v927, 19
        %v1145 = vpop.permute.xlu0 %1144
        %1146 = vrot.lane.b32.xlu0 %v928, 19
        %v1147 = vpop.permute.xlu0 %1146
        %1148 = vrot.lane.b32.xlu0 %v919, 19
        %v1149 = vpop.permute.xlu0 %1148
        %1150 = vrot.lane.b32.xlu0 %v929, 19
        %v1151 = vpop.permute.xlu0 %1150
        %1152 = vrot.lane.b32.xlu0 %v930, 19
        %v1153 = vpop.permute.xlu0 %1152
        %1154 = vrot.lane.b32.xlu0 %v931, 19
        %v1155 = vpop.permute.xlu0 %1154
        %1156 = vrot.lane.b32.xlu0 %v933, 19
        %v1157 = vpop.permute.xlu0 %1156
        %1158 = vrot.lane.b32.xlu0 %v948, 19
        %v1159 = vpop.permute.xlu0 %1158
        %1160 = vrot.lane.b32.xlu0 %v949, 19
        %v1161 = vpop.permute.xlu0 %1160
        %1162 = vrot.lane.b32.xlu0 %v950, 19
        %v1163 = vpop.permute.xlu0 %1162
        %1164 = vrot.lane.b32.xlu0 %v941, 19
        %v1165 = vpop.permute.xlu0 %1164
        %1166 = vrot.lane.b32.xlu0 %v951, 19
        %v1167 = vpop.permute.xlu0 %1166
        %1168 = vrot.lane.b32.xlu0 %v952, 19
        %v1169 = vpop.permute.xlu0 %1168
        %1170 = vrot.lane.b32.xlu0 %v953, 19
        %v1171 = vpop.permute.xlu0 %1170
        %1172 = vrot.lane.b32.xlu0 %v955, 19
        %v1173 = vpop.permute.xlu0 %1172
        %1174 = vrot.lane.b32.xlu0 %v970, 19
        %v1175 = vpop.permute.xlu0 %1174
        %1176 = vrot.lane.b32.xlu0 %v971, 19
        %v1177 = vpop.permute.xlu0 %1176
        %1178 = vrot.lane.b32.xlu0 %v972, 19
        %v1179 = vpop.permute.xlu0 %1178
        %1180 = vrot.lane.b32.xlu0 %v963, 19
        %v1181 = vpop.permute.xlu0 %1180
        %1182 = vrot.lane.b32.xlu0 %v973, 19
        %v1183 = vpop.permute.xlu0 %1182
        %1184 = vrot.lane.b32.xlu0 %v974, 19
        %v1185 = vpop.permute.xlu0 %1184
        %1186 = vrot.lane.b32.xlu0 %v975, 19
        %v1187 = vpop.permute.xlu0 %1186
        %1188 = vrot.lane.b32.xlu0 %v977, 19
        %v1189 = vpop.permute.xlu0 %1188
        %1190 = vrot.lane.b32.xlu0 %v992, 19
        %v1191 = vpop.permute.xlu0 %1190
        %1192 = vrot.lane.b32.xlu0 %v993, 19
        %v1193 = vpop.permute.xlu0 %1192
        %1194 = vrot.lane.b32.xlu0 %v994, 19
        %v1195 = vpop.permute.xlu0 %1194
        %1196 = vrot.lane.b32.xlu0 %v985, 19
        %v1197 = vpop.permute.xlu0 %1196
        %1198 = vrot.lane.b32.xlu0 %v995, 19
        %v1199 = vpop.permute.xlu0 %1198
        %1200 = vrot.lane.b32.xlu0 %v996, 19
        %v1201 = vpop.permute.xlu0 %1200
        %1202 = vrot.lane.b32.xlu0 %v997, 19
        %v1203 = vpop.permute.xlu0 %1202
        %vm1204 = vcmask 154624
        %v1205 = vsel %vm1204, %v1061, %v1063
        %v1206 = vsel %vm1204, %v1063, %v1065
        %v1207 = vsel %vm1204, %v1065, %v1067
        %v1208 = vsel %vm1204, %v1069, %v1071
        %v1209 = vsel %vm1204, %v1071, %v1073
        %v1210 = vsel %vm1204, %v1073, %v1075
        %v1211 = vsel %vm1204, %v1077, %v1079
        %v1212 = vsel %vm1204, %v1079, %v1081
        %v1213 = vsel %vm1204, %v1081, %v1083
        %v1214 = vsel %vm1204, %v1085, %v1087
        %v1215 = vsel %vm1204, %v1087, %v1089
        %v1216 = vsel %vm1204, %v1089, %v1091
        %v1217 = vsel %vm1204, %v1093, %v1095
        %v1218 = vsel %vm1204, %v1095, %v1097
        %v1219 = vsel %vm1204, %v1097, %v1099
        %v1220 = vsel %vm1204, %v1101, %v1103
        %v1221 = vsel %vm1204, %v1103, %v1105
        %v1222 = vsel %vm1204, %v1105, %v1107
        %v1223 = vsel %vm1204, %v1109, %v1111
        %v1224 = vsel %vm1204, %v1111, %v1113
        %v1225 = vsel %vm1204, %v1113, %v1115
        %v1226 = vsel %vm1204, %v1117, %v1119
        %v1227 = vsel %vm1204, %v1119, %v1121
        %v1228 = vsel %vm1204, %v1121, %v1123
        %v1229 = vsel %vm1204, %v1125, %v1127
        %v1230 = vsel %vm1204, %v1127, %v1129
        %v1231 = vsel %vm1204, %v1129, %v1131
        %v1232 = vsel %vm1204, %v1133, %v1135
        %v1233 = vsel %vm1204, %v1135, %v1137
        %v1234 = vsel %vm1204, %v1137, %v1139
        %v1235 = vsel %vm1204, %v1141, %v1143
        %v1236 = vsel %vm1204, %v1143, %v1145
        %v1237 = vsel %vm1204, %v1145, %v1147
        %v1238 = vsel %vm1204, %v1149, %v1151
        %v1239 = vsel %vm1204, %v1151, %v1153
        %v1240 = vsel %vm1204, %v1153, %v1155
        %v1241 = vsel %vm1204, %v1157, %v1159
        %v1242 = vsel %vm1204, %v1159, %v1161
        %v1243 = vsel %vm1204, %v1161, %v1163
        %v1244 = vsel %vm1204, %v1165, %v1167
        %v1245 = vsel %vm1204, %v1167, %v1169
        %v1246 = vsel %vm1204, %v1169, %v1171
        %v1247 = vsel %vm1204, %v1173, %v1175
        %v1248 = vsel %vm1204, %v1175, %v1177
        %v1249 = vsel %vm1204, %v1177, %v1179
        %v1250 = vsel %vm1204, %v1181, %v1183
        %v1251 = vsel %vm1204, %v1183, %v1185
        %v1252 = vsel %vm1204, %v1185, %v1187
        %v1253 = vsel %vm1204, %v1189, %v1191
        %v1254 = vsel %vm1204, %v1191, %v1193
        %v1255 = vsel %vm1204, %v1193, %v1195
        %v1256 = vsel %vm1204, %v1197, %v1199
        %v1257 = vsel %vm1204, %v1199, %v1201
        %v1258 = vsel %vm1204, %v1201, %v1203
        %vm1313 = vcmask 261120
        %v1315 = vsel %vm1313, %v1052, 0
        %v1318 = vsel %vm1313, %v1055, 0
        %1320 = vmatprep.subr.bf16.mxu0 %v1227
        %1321 = vmatpush1.bf16.msra.mxu0 %v1226
        %1322 = vmatprep.subr.bf16.mxu0 %v1224
        %1323 = vmatpush1.bf16.msra.mxu0 %v1223
        %1324 = vmatprep.subr.bf16.mxu0 %v1221
        %1325 = vmatpush1.bf16.msra.mxu0 %v1220
        %1326 = vmatprep.subr.bf16.mxu0 %v1218
        %1327 = vmatpush1.bf16.msra.mxu0 %v1217
        %1328 = vmatprep.subr.bf16.mxu0 %v1215
        %1329 = vmatpush1.bf16.msra.mxu0 %v1214
        %1330 = vmatprep.subr.bf16.mxu0 %v1212
        %1331 = vmatpush1.bf16.msra.mxu0 %v1211
        %1332 = vmatprep.subr.bf16.mxu0 %v1209
        %1333 = vmatpush1.bf16.msra.mxu0 %v1208
        %1334 = vmatprep.subr.bf16.mxu0 %v1206
        %1335 = vmatpush1.bf16.msra.mxu0 %v1205
        %1336 = vmatprep.subr.bf16.mxu0 %v1251
        %1337 = vmatpush2.bf16.msra.mxu0 %v1250
        %1338 = vmatprep.subr.bf16.mxu0 %v1248
        %1339 = vmatpush2.bf16.msra.mxu0 %v1247
        %1340 = vmatprep.subr.bf16.mxu0 %v1245
        %1341 = vmatpush2.bf16.msra.mxu0 %v1244
        %1342 = vmatprep.subr.bf16.mxu0 %v1242
        %1343 = vmatpush2.bf16.msra.mxu0 %v1241
        %1344 = vmatprep.subr.bf16.mxu0 %v1239
        %1345 = vmatpush2.bf16.msra.mxu0 %v1238
        %1346 = vmatprep.subr.bf16.mxu0 %v1236
        %1347 = vmatpush2.bf16.msra.mxu0 %v1235
        %1348 = vmatprep.subr.bf16.mxu0 %v1233
        %1349 = vmatpush2.bf16.msra.mxu0 %v1232
        %1350 = vmatprep.subr.bf16.mxu0 %v1230
        %1351 = vmatpush2.bf16.msra.mxu0 %v1229
        %1352 = vmatprep.mubr.bf16.mxu0 %v1051
        %1353 = vmatmul.mubr.bf16.gmra.mxu0 %v1050
        %v1354 = vpop.f32.mrf.mxu0
        %v1355 = vadd.f32 %v1013, %v1354
        %v1356 = vpop.f32.mrf.mxu0
        %v1357 = vadd.f32 %v1013, %v1356
        %v1358 = vpop.f32.mrf.mxu0
        %v1359 = vadd.f32 %v1018, %v1358
        %v1360 = vpop.f32.mrf.mxu0
        %v1361 = vadd.f32 %v1018, %v1360
        %1362 = vmatprep.mubr.bf16.mxu0 %v1054
        %1363 = vmatmul.mubr.bf16.gmra.mxu0 %v1053
        %v1364 = vpop.f32.mrf.mxu0
        %v1365 = vadd.f32 %v1023, %v1364
        %v1366 = vpop.f32.mrf.mxu0
        %v1367 = vadd.f32 %v1023, %v1366
        %v1368 = vpop.f32.mrf.mxu0
        %v1369 = vadd.f32 %v1028, %v1368
        %v1370 = vpop.f32.mrf.mxu0
        %v1371 = vadd.f32 %v1028, %v1370
        %1372 = vdwg.mxu0
        %1373 = vmatprep.subr.bf16.mxu0 0
        %1374 = vmatpush1.bf16.msra.mxu0 0
        %1375 = vmatprep.subr.bf16.mxu0 0
        %1376 = vmatpush1.bf16.msra.mxu0 0
        %1377 = vmatprep.subr.bf16.mxu0 0
        %1378 = vmatpush1.bf16.msra.mxu0 0
        %1379 = vmatprep.subr.bf16.mxu0 0
        %1380 = vmatpush1.bf16.msra.mxu0 0
        %1381 = vmatprep.subr.bf16.mxu0 0
        %1382 = vmatpush1.bf16.msra.mxu0 0
        %1383 = vmatprep.subr.bf16.mxu0 0
        %1384 = vmatpush1.bf16.msra.mxu0 0
        %1385 = vmatprep.subr.bf16.mxu0 %v1257
        %1386 = vmatpush1.bf16.msra.mxu0 %v1256
        %1387 = vmatprep.subr.bf16.mxu0 %v1254
        %1388 = vmatpush1.bf16.msra.mxu0 %v1253
        %1389 = vmatprep.subr.bf16.mxu0 0
        %1390 = vmatpush2.bf16.msra.mxu0 0
        %1391 = vmatprep.subr.bf16.mxu0 0
        %1392 = vmatpush2.bf16.msra.mxu0 0
        %1393 = vmatprep.subr.bf16.mxu0 0
        %1394 = vmatpush2.bf16.msra.mxu0 0
        %1395 = vmatprep.subr.bf16.mxu0 0
        %1396 = vmatpush2.bf16.msra.mxu0 0
        %1397 = vmatprep.subr.bf16.mxu0 0
        %1398 = vmatpush2.bf16.msra.mxu0 0
        %1399 = vmatprep.subr.bf16.mxu0 0
        %1400 = vmatpush2.bf16.msra.mxu0 0
        %1401 = vmatprep.subr.bf16.mxu0 0
        %1402 = vmatpush2.bf16.msra.mxu0 0
        %1403 = vmatprep.subr.bf16.mxu0 0
        %1404 = vmatpush2.bf16.msra.mxu0 0
        %1405 = vmatprep.mubr.bf16.mxu0 0
        %1406 = vmatmul.mubr.bf16.gmra.mxu0 %v1315
        %v1407 = vpop.f32.mrf.mxu0
        %v1408 = vadd.f32 %v1355, %v1407
        %v1409 = vpop.f32.mrf.mxu0
        %v1410 = vadd.f32 %v1357, %v1409
        %v1411 = vpop.f32.mrf.mxu0
        %v1412 = vadd.f32 %v1359, %v1411
        %v1413 = vpop.f32.mrf.mxu0
        %v1414 = vadd.f32 %v1361, %v1413
        %1415 = vmatprep.mubr.bf16.mxu0 0
        %1416 = vmatmul.mubr.bf16.gmra.mxu0 %v1318
        %v1417 = vpop.f32.mrf.mxu0
        %v1418 = vadd.f32 %v1365, %v1417
        %v1419 = vpop.f32.mrf.mxu0
        %v1420 = vadd.f32 %v1367, %v1419
        %v1421 = vpop.f32.mrf.mxu0
        %v1422 = vadd.f32 %v1369, %v1421
        %v1423 = vpop.f32.mrf.mxu0
        %v1424 = vadd.f32 %v1371, %v1423
        %1425 = vdwg.mxu0
        %1426 = vmatprep.subr.bf16.mxu0 0
        %1427 = vmatpush1.bf16.msra.mxu0 %v1228
        %1428 = vmatprep.subr.bf16.mxu0 0
        %1429 = vmatpush1.bf16.msra.mxu0 %v1225
        %1430 = vmatprep.subr.bf16.mxu0 0
        %1431 = vmatpush1.bf16.msra.mxu0 %v1222
        %1432 = vmatprep.subr.bf16.mxu0 0
        %1433 = vmatpush1.bf16.msra.mxu0 %v1219
        %1434 = vmatprep.subr.bf16.mxu0 0
        %1435 = vmatpush1.bf16.msra.mxu0 %v1216
        %1436 = vmatprep.subr.bf16.mxu0 0
        %1437 = vmatpush1.bf16.msra.mxu0 %v1213
        %1438 = vmatprep.subr.bf16.mxu0 0
        %1439 = vmatpush1.bf16.msra.mxu0 %v1210
        %1440 = vmatprep.subr.bf16.mxu0 0
        %1441 = vmatpush1.bf16.msra.mxu0 %v1207
        %1442 = vmatprep.subr.bf16.mxu0 0
        %1443 = vmatpush2.bf16.msra.mxu0 %v1252
        %1444 = vmatprep.subr.bf16.mxu0 0
        %1445 = vmatpush2.bf16.msra.mxu0 %v1249
        %1446 = vmatprep.subr.bf16.mxu0 0
        %1447 = vmatpush2.bf16.msra.mxu0 %v1246
        %1448 = vmatprep.subr.bf16.mxu0 0
        %1449 = vmatpush2.bf16.msra.mxu0 %v1243
        %1450 = vmatprep.subr.bf16.mxu0 0
        %1451 = vmatpush2.bf16.msra.mxu0 %v1240
        %1452 = vmatprep.subr.bf16.mxu0 0
        %1453 = vmatpush2.bf16.msra.mxu0 %v1237
        %1454 = vmatprep.subr.bf16.mxu0 0
        %1455 = vmatpush2.bf16.msra.mxu0 %v1234
        %1456 = vmatprep.subr.bf16.mxu0 0
        %1457 = vmatpush2.bf16.msra.mxu0 %v1231
        %1458 = vmatprep.mubr.bf16.mxu0 %v1051
        %1459 = vmatmul.mubr.bf16.gmra.mxu0 %v1050
        %v1460 = vpop.f32.mrf.mxu0
        %v1461 = vadd.f32 %v1013, %v1460
        %v1462 = vpop.f32.mrf.mxu0
        %v1463 = vpop.f32.mrf.mxu0
        %v1464 = vadd.f32 %v1018, %v1463
        %v1465 = vpop.f32.mrf.mxu0
        %1466 = vmatprep.mubr.bf16.mxu0 %v1054
        %1467 = vmatmul.mubr.bf16.gmra.mxu0 %v1053
        %v1468 = vpop.f32.mrf.mxu0
        %v1469 = vadd.f32 %v1023, %v1468
        %v1470 = vpop.f32.mrf.mxu0
        %v1471 = vpop.f32.mrf.mxu0
        %v1472 = vadd.f32 %v1028, %v1471
        %v1473 = vpop.f32.mrf.mxu0
        %1474 = vdwg.mxu0
        %1475 = vmatprep.subr.bf16.mxu0 0
        %1476 = vmatpush1.bf16.msra.mxu0 0
        %1477 = vmatprep.subr.bf16.mxu0 0
        %1478 = vmatpush1.bf16.msra.mxu0 0
        %1479 = vmatprep.subr.bf16.mxu0 0
        %1480 = vmatpush1.bf16.msra.mxu0 0
        %1481 = vmatprep.subr.bf16.mxu0 0
        %1482 = vmatpush1.bf16.msra.mxu0 0
        %1483 = vmatprep.subr.bf16.mxu0 0
        %1484 = vmatpush1.bf16.msra.mxu0 0
        %1485 = vmatprep.subr.bf16.mxu0 0
        %1486 = vmatpush1.bf16.msra.mxu0 0
        %1487 = vmatprep.subr.bf16.mxu0 0
        %1488 = vmatpush1.bf16.msra.mxu0 %v1258
        %1489 = vmatprep.subr.bf16.mxu0 0
        %1490 = vmatpush1.bf16.msra.mxu0 %v1255
        %1491 = vmatprep.subr.bf16.mxu0 0
        %1492 = vmatpush2.bf16.msra.mxu0 0
        %1493 = vmatprep.subr.bf16.mxu0 0
        %1494 = vmatpush2.bf16.msra.mxu0 0
        %1495 = vmatprep.subr.bf16.mxu0 0
        %1496 = vmatpush2.bf16.msra.mxu0 0
        %1497 = vmatprep.subr.bf16.mxu0 0
        %1498 = vmatpush2.bf16.msra.mxu0 0
        %1499 = vmatprep.subr.bf16.mxu0 0
        %1500 = vmatpush2.bf16.msra.mxu0 0
        %1501 = vmatprep.subr.bf16.mxu0 0
        %1502 = vmatpush2.bf16.msra.mxu0 0
        %1503 = vmatprep.subr.bf16.mxu0 0
        %1504 = vmatpush2.bf16.msra.mxu0 0
        %1505 = vmatprep.subr.bf16.mxu0 0
        %1506 = vmatpush2.bf16.msra.mxu0 0
        %1507 = vmatprep.mubr.bf16.mxu0 0
        %1508 = vmatmul.mubr.bf16.gmra.mxu0 %v1315
        %v1509 = vpop.f32.mrf.mxu0
        %v1510 = vadd.f32 %v1461, %v1509
        %v1511 = vpop.f32.mrf.mxu0
        %v1512 = vpop.f32.mrf.mxu0
        %v1513 = vadd.f32 %v1464, %v1512
        %v1514 = vpop.f32.mrf.mxu0
        %1515 = vmatprep.mubr.bf16.mxu0 0
        %1516 = vmatmul.mubr.bf16.gmra.mxu0 %v1318
        %v1517 = vpop.f32.mrf.mxu0
        %v1518 = vadd.f32 %v1469, %v1517
        %v1519 = vpop.f32.mrf.mxu0
        %v1520 = vpop.f32.mrf.mxu0
        %v1521 = vadd.f32 %v1472, %v1520
        %v1522 = vpop.f32.mrf.mxu0
        %1523 = vdwg.mxu0
        %v1524 = vld [vmem:[%s284] sm:$0xff]
        %v1525 = vld [vmem:[%s284 + $0x8] sm:$0xff]
        %v1526 = vld [vmem:[%s284 + $0x10] sm:$0xff]
        %v1527 = vld [vmem:[%s284 + $0x18] sm:$0xff]
        %v1528 = vld [vmem:[%s284 + $0x20] sm:$0xff]
        %v1529 = vld [vmem:[%s284 + $0x28] sm:$0xff]
        %v1530 = vld [vmem:[%s284 + $0x30] sm:$0xff]
        %v1531 = vld [vmem:[%s284 + $0x38] sm:$0xff]
        %v1532 = vld [vmem:[%s284 + $0x40] sm:$0xff]
        %v1533 = vld [vmem:[%s284 + $0x48] sm:$0xff]
        %v1534 = vld [vmem:[%s284 + $0x50] sm:$0xff]
        %v1535 = vld [vmem:[%s284 + $0x58] sm:$0xff]
        %v1536 = vadd.f32 %v1408, %v1524
        %v1537 = vadd.f32 %v1410, %v1525
        %v1538 = vadd.f32 %v1510, %v1526
        %v1539 = vadd.f32 %v1412, %v1527
        %v1540 = vadd.f32 %v1414, %v1528
        %v1541 = vadd.f32 %v1513, %v1529
        %v1542 = vadd.f32 %v1418, %v1530
        %v1543 = vadd.f32 %v1420, %v1531
        %v1544 = vadd.f32 %v1518, %v1532
        %v1545 = vadd.f32 %v1422, %v1533
        %v1546 = vadd.f32 %v1424, %v1534
        %v1547 = vadd.f32 %v1521, %v1535
        %v1548 = vmax.f32 %v1536, 0.0
        %v1549 = vmax.f32 %v1537, 0.0
        %v1550 = vmax.f32 %v1538, 0.0
        %v1551 = vmax.f32 %v1539, 0.0
        %v1552 = vmax.f32 %v1540, 0.0
        %v1553 = vmax.f32 %v1541, 0.0
        %v1554 = vmax.f32 %v1542, 0.0
        %v1555 = vmax.f32 %v1543, 0.0
        %v1556 = vmax.f32 %v1544, 0.0
        %v1557 = vmax.f32 %v1545, 0.0
        %v1558 = vmax.f32 %v1546, 0.0
        %v1559 = vmax.f32 %v1547, 0.0
        %1560 = vst [vmem:[%s284] sm:$0xff] %v1548
        %1561 = vst [vmem:[%s284 + $0x8] sm:$0xff] %v1549
        %1562 = vst [vmem:[%s284 + $0x10] sm:$0xff] %v1550
        %1563 = vst [vmem:[%s284 + $0x18] sm:$0xff] %v1551
        %1564 = vst [vmem:[%s284 + $0x20] sm:$0xff] %v1552
        %1565 = vst [vmem:[%s284 + $0x28] sm:$0xff] %v1553
        %1566 = vst [vmem:[%s284 + $0x30] sm:$0xff] %v1554
        %1567 = vst [vmem:[%s284 + $0x38] sm:$0xff] %v1555
        %1568 = vst [vmem:[%s284 + $0x40] sm:$0xff] %v1556
        %1569 = vst [vmem:[%s284 + $0x48] sm:$0xff] %v1557
        %1570 = vst [vmem:[%s284 + $0x50] sm:$0xff] %v1558
        %1571 = vst [vmem:[%s284 + $0x58] sm:$0xff] %v1559
        %s1572 = sand.u32 %s163, 1
        %s1573 = scalar_lea.sflag [#allocation5], %s1572
        %s1574 = sand.u32 %s163, 1
        %s1575 = smul.addr %s1574, 96
        %s1576 = scalar_lea.vmem [#allocation8], %s1575
        // Predicated region
        $region53: #{tpu_custom_call.1} parent=43 // pred_check
          %p1577 = pneg %p173
        $region54: #{tpu_custom_call.1} parent=43 // pred_check_branch
          %1579 = sbr.rel (%p1577) target = $region56
        $region55: #{tpu_custom_call.1} parent=43 // pred_region
          %s1581 = ssub.s32 1536, 1536
          %1582 = vsyncadd %s1573, %s1581
          %s1583 = smul.addr %s24, 12
          %s1584 = smul.addr %s1583, 128
          %s1585 = scalar_lea.hbm %s6, %s1584
          %s1586 = sshll.u32 %s1576, 4
          %s1587 = int_to_ptr.vmem [resolvable:$true] %s1586
          %1592 = dma.vmem_to_hbm [thread:$0]  %s1587, 1536, %s1585, %s1573, 384, 384, 24
        $region56: #{tpu_custom_call.1} parent=43 // pred_fallthru
          _
      $region44: #{tpu_custom_call.1} parent=5 // pred_fallthru
        _
      %p1593 = scmp.le.s32.totalorder 2, %s19
      // Predicated region
      $region57: #{tpu_custom_call.1} parent=5 // pred_check
        %p1594 = pneg %p1593
      $region58: #{tpu_custom_call.1} parent=5 // pred_check_branch
        %1596 = sbr.rel (%p1594) target = $region60
      $region59: #{tpu_custom_call.1} parent=5 // pred_region
        %s1597 = ssub.s32 %s19, 2
        // Predicated region
        $region61: #{tpu_custom_call.1} parent=59 // pred_check
          %p1598 = pneg %p179
        $region62: #{tpu_custom_call.1} parent=59 // pred_check_branch
          %1600 = sbr.rel (%p1598) target = $region64
        $region63: #{tpu_custom_call.1} parent=59 // pred_region
          %s1601 = sand.u32 %s164, 1
          %s1602 = scalar_lea.sflag [#allocation5], %s1601
          %s1603 = sand.u32 %s164, 1
          %s1604 = smul.addr %s1603, 96
          %s1605 = scalar_lea.vmem [#allocation8], %s1604
          %1606 = dma.done %s1602, 1536
        $region64: #{tpu_custom_call.1} parent=59 // pred_fallthru
          _
      $region60: #{tpu_custom_call.1} parent=5 // pred_fallthru
        _
    $region6: #{tpu_custom_call.1} parent=1 // loop_footer
      %s23 = sadd.s32 1, %s19
    $region7: #{tpu_custom_call.1} parent=1 // loop_footer_branch
      %18 = sbr.rel target = $region3
    $region8: #{tpu_custom_call.1} parent=1 // loop_exit
      _
    %1607 = vsyncpa [#allocation4], 1
    %s1608 = scalar_lea.sflag [#allocation4], 1
    %1609 = vsyncpa %s1608, 1
    %1610 = vsyncpa [#allocation7], 1
    %1611 = vsyncpa [#allocation5], 1
    %s1612 = scalar_lea.sflag [#allocation5], 1
    %1613 = vsyncpa %s1612, 1

</llo_original>
